<compile_context>
chip_gen: v7x
topology: tpu7x:2x2x1
jax: 0.10.0
libtpu: 0.0.40
codegen_flags: <defaults>
</compile_context>

<pallas_src>
import jax
import jax.numpy as jnp
from jax.experimental import pallas as pl
from jax.experimental.pallas import tpu as pltpu

OUT_PAD = 128   # lane-padded width of the final (5-wide) layer
MIN_TILE = 16   # bf16 packs 2 rows per sublane -> batch tiles in multiples of 16


def _round_up(n, m):
    return ((n + m - 1) // m) * m


def _mlp_kernel(x_ref, w1_ref, b1_ref, w2_ref, b2_ref, w3_ref, b3_ref, o_ref):
    # Layer 1: Linear(input_size, 512) + ReLU.
    # x tile and w1 are already bf16 -> straight to the MXU, f32 accumulate;
    # bias-add + ReLU stay in f32 (v5e VPU has no bf16 path).
    h1 = jnp.dot(x_ref[...], w1_ref[...], preferred_element_type=jnp.float32)
    h1 = jnp.maximum(h1 + b1_ref[...], 0.0)
    # Dropout2d(p=0.5) -> identity in eval mode.

    # Layer 2: Linear(512, 256) + ReLU
    h2 = jnp.dot(h1.astype(jnp.bfloat16), w2_ref[...],
                 preferred_element_type=jnp.float32)
    h2 = jnp.maximum(h2 + b2_ref[...], 0.0)
    # Dropout2d(p=0.5) -> identity in eval mode.

    # Layer 3: Linear(256, 5) padded to 128 lanes (unmasked vst output store)
    out = jnp.dot(h2.astype(jnp.bfloat16), w3_ref[...],
                  preferred_element_type=jnp.float32)
    o_ref[...] = (out + b3_ref[...]).astype(o_ref.dtype)


def prepare_params(params):
    """One-time parameter prep (hoisted out of the per-call forward path).

    Weights -> bf16 (half the DMA / VMEM footprint, fast MXU path), biases ->
    f32 rows, final 5-wide layer zero-padded to 128 output lanes.
    """
    w1, b1, w2, b2, w3, b3 = params
    out_dim = w3.shape[1]
    w3p = jnp.zeros((w3.shape[0], OUT_PAD), jnp.bfloat16).at[:, :out_dim].set(
        w3.astype(jnp.bfloat16))
    b3p = jnp.zeros((1, OUT_PAD), jnp.float32).at[:, :out_dim].set(
        b3.reshape(1, -1).astype(jnp.float32))
    return (w1.astype(jnp.bfloat16), b1.reshape(1, -1).astype(jnp.float32),
            w2.astype(jnp.bfloat16), b2.reshape(1, -1).astype(jnp.float32),
            w3p, b3p, out_dim)


def _pick_tile_b(batch):
    if batch >= 2 * MIN_TILE:
        # At least 2 grid steps (both v7x TensorCores get work under the
        # "parallel" batch axis), capped at 512 rows per step (~85% of HBM
        # roofline; a 512 x 1024 bf16 x tile is only ~1 MiB per buffer).
        return min(512, _round_up(pl.cdiv(batch, 2), MIN_TILE))
    return _round_up(max(batch, 1), MIN_TILE)


def my_dnn_forward(x, prepared_params, *, tile_b=None, out_dtype=jnp.float32):
    """x: [B, C, H, W] float. prepared_params: output of prepare_params(...).

    Returns logits [B, 5] in out_dtype (f32 by default)."""
    w1b, b1f, w2b, b2f, w3p, b3p, out_dim = prepared_params
    B = x.shape[0]
    # Same as torch's x.view(x.size(0), -1); stream to the kernel in bf16
    # (x is the dominant HBM traffic of this kernel).
    x_flat = x.reshape(B, -1).astype(jnp.bfloat16)
    input_size = x_flat.shape[1]
    assert input_size == w1b.shape[0], (input_size, w1b.shape)

    if tile_b is None:
        tile_b = _pick_tile_b(B)
    tile_b = _round_up(tile_b, MIN_TILE)

    num_blocks = pl.cdiv(B, tile_b)      # ragged last block instead of jnp.pad on x
    rows_out = num_blocks * tile_b       # output blocks stay full -> unmasked stores

    resident = lambda a: pl.BlockSpec(a.shape, lambda i: (0,) * a.ndim)

    out_padded = pl.pallas_call(
        _mlp_kernel,
        out_shape=jax.ShapeDtypeStruct((rows_out, OUT_PAD), out_dtype),
        grid_spec=pltpu.PrefetchScalarGridSpec(
            num_scalar_prefetch=0,
            grid=(num_blocks,),
            in_specs=[
                pl.BlockSpec((tile_b, input_size), lambda i: (i, 0)),  # x tiles stream
                resident(w1b), resident(b1f),                          # weights stay VMEM-resident
                resident(w2b), resident(b2f),
                resident(w3p), resident(b3p),
            ],
            out_specs=pl.BlockSpec((tile_b, OUT_PAD), lambda i: (i, 0)),
        ),
        compiler_params=pltpu.CompilerParams(
            # Shard batch tiles over v7x's 2 TensorCores; harmless on v5e/v6e.
            dimension_semantics=("parallel",),
            # Above the 32 MiB scoped default (room for bigger tiles on
            # v5e/v6e), below v7x's 64 MiB physical VMEM.
            vmem_limit_bytes=48 * 1024 * 1024,
        ),
    )(x_flat, w1b, b1f, w2b, b2f, w3p, b3p)

    # Rows >= B come from out-of-bounds (garbage) x reads of the ragged last
    # block and are discarded here; never reduce over out_padded unmasked.
    return out_padded[:B, :out_dim]


def init_params(key, input_size, dtype=jnp.float32):
    """Deterministic init mimicking nn.Linear default (uniform +/- 1/sqrt(fan_in)).

    Weights are stored as [in_features, out_features]."""
    dims = [(input_size, 512), (512, 256), (256, 5)]
    params = []
    for (fan_in, fan_out) in dims:
        key, kw, kb = jax.random.split(key, 3)
        bound = 1.0 / (fan_in ** 0.5)
        w = jax.random.uniform(kw, (fan_in, fan_out), dtype, -bound, bound)
        b = jax.random.uniform(kb, (1, fan_out), dtype, -bound, bound)
        params += [w, b]
    return tuple(params)


def _reference_forward(x, params):
    """Pure-JAX reference with the same bf16-matmul / f32-accumulate recipe."""
    w1, b1, w2, b2, w3, b3 = params
    xf = x.reshape(x.shape[0], -1)

    def lin(a, w, b):
        return (jnp.dot(a.astype(jnp.bfloat16), w.astype(jnp.bfloat16),
                        preferred_element_type=jnp.float32)
                + b.reshape(1, -1).astype(jnp.float32))

    h1 = jnp.maximum(lin(xf, w1, b1), 0.0)
    h2 = jnp.maximum(lin(h1, w2, b2), 0.0)
    return lin(h2, w3, b3)


if __name__ == "__main__":
    key = jax.random.PRNGKey(0)
    k_x, k_p = jax.random.split(key)

    # Small shapes consistent with the module: NCHW input, flattened to
    # input_size = C*H*W = 4*16*16 = 1024.
    B, C, H, W = 2, 4, 16, 16
    input_size = C * H * W

    x = jax.random.normal(k_x, (B, C, H, W), dtype=jnp.float32)
    params = init_params(k_p, input_size)
    prepared = prepare_params(params)   # one-time weight prep (bf16 cast + lane pad)

    out = my_dnn_forward(x, prepared)
    out = jax.block_until_ready(out)

    ref = _reference_forward(x, params)
    assert out.shape == (B, 5), out.shape
    assert jnp.allclose(out, ref, atol=2e-2, rtol=2e-2), "mismatch vs reference"

    print("KERNEL_OK")
</pallas_src>

<mosaic_0001>
module attributes {stable_mosaic.version = 11 : i64} {
  func.func @_mlp_kernel(%arg0: i32, %arg1: memref<16x1024xbf16, #tpu.memory_space<vmem>>, %arg2: memref<1024x512xbf16, #tpu.memory_space<vmem>>, %arg3: memref<1x512xf32, #tpu.memory_space<vmem>>, %arg4: memref<512x256xbf16, #tpu.memory_space<vmem>>, %arg5: memref<1x256xf32, #tpu.memory_space<vmem>>, %arg6: memref<256x128xbf16, #tpu.memory_space<vmem>>, %arg7: memref<1x128xf32, #tpu.memory_space<vmem>>, %arg8: memref<16x128xf32, #tpu.memory_space<vmem>>) attributes {dimension_semantics = [#tpu.dimension_semantics<parallel>], iteration_bounds = array<i64: 1>, scalar_prefetch = 0 : i64, scratch_operands = 0 : i64, tpu.core_type = #tpu.core_type<tc>, window_params = [{transform_indices = @transform_0, window_bounds = array<i64: 16, 1024>}, {pipeline_mode = #tpu.pipeline_mode<synchronous>, transform_indices = @transform_1, window_bounds = array<i64: 1024, 512>}, {pipeline_mode = #tpu.pipeline_mode<synchronous>, transform_indices = @transform_2, window_bounds = array<i64: 1, 512>}, {pipeline_mode = #tpu.pipeline_mode<synchronous>, transform_indices = @transform_3, window_bounds = array<i64: 512, 256>}, {pipeline_mode = #tpu.pipeline_mode<synchronous>, transform_indices = @transform_4, window_bounds = array<i64: 1, 256>}, {pipeline_mode = #tpu.pipeline_mode<synchronous>, transform_indices = @transform_5, window_bounds = array<i64: 256, 128>}, {pipeline_mode = #tpu.pipeline_mode<synchronous>, transform_indices = @transform_6, window_bounds = array<i64: 1, 128>}, {transform_indices = @transform_7, window_bounds = array<i64: 16, 128>}]} {
    %c0 = arith.constant 0 : index
    %c0_0 = arith.constant 0 : index
    %0 = vector.load %arg1[%c0, %c0_0] : memref<16x1024xbf16, #tpu.memory_space<vmem>>, vector<16x1024xbf16>
    %c0_1 = arith.constant 0 : index
    %c0_2 = arith.constant 0 : index
    %1 = vector.load %arg2[%c0_1, %c0_2] : memref<1024x512xbf16, #tpu.memory_space<vmem>>, vector<1024x512xbf16>
    %cst = arith.constant dense<0.000000e+00> : vector<16x512xf32>
    %2 = tpu.matmul %0, %1, %cst {dimension_numbers = #tpu.dot_dimension_numbers<[1], [0], [0], [1], [0, 0, 1, 1], [], []>} : vector<16x1024xbf16>, vector<1024x512xbf16>, vector<16x512xf32> -> vector<16x512xf32>
    %c0_3 = arith.constant 0 : index
    %c0_4 = arith.constant 0 : index
    %3 = vector.load %arg3[%c0_3, %c0_4] : memref<1x512xf32, #tpu.memory_space<vmem>>, vector<1x512xf32>
    %4 = vector.broadcast %3 : vector<1x512xf32> to vector<16x512xf32>
    %5 = arith.addf %2, %4 : vector<16x512xf32>
    %cst_5 = arith.constant 0.000000e+00 : f32
    %6 = vector.broadcast %cst_5 : f32 to vector<16x512xf32>
    %7 = arith.maximumf %5, %6 : vector<16x512xf32>
    %8 = arith.truncf %7 : vector<16x512xf32> to vector<16x512xbf16>
    %c0_6 = arith.constant 0 : index
    %c0_7 = arith.constant 0 : index
    %9 = vector.load %arg4[%c0_6, %c0_7] : memref<512x256xbf16, #tpu.memory_space<vmem>>, vector<512x256xbf16>
    %cst_8 = arith.constant dense<0.000000e+00> : vector<16x256xf32>
    %10 = tpu.matmul %8, %9, %cst_8 {dimension_numbers = #tpu.dot_dimension_numbers<[1], [0], [0], [1], [0, 0, 1, 1], [], []>} : vector<16x512xbf16>, vector<512x256xbf16>, vector<16x256xf32> -> vector<16x256xf32>
    %c0_9 = arith.constant 0 : index
    %c0_10 = arith.constant 0 : index
    %11 = vector.load %arg5[%c0_9, %c0_10] : memref<1x256xf32, #tpu.memory_space<vmem>>, vector<1x256xf32>
    %12 = vector.broadcast %11 : vector<1x256xf32> to vector<16x256xf32>
    %13 = arith.addf %10, %12 : vector<16x256xf32>
    %cst_11 = arith.constant 0.000000e+00 : f32
    %14 = vector.broadcast %cst_11 : f32 to vector<16x256xf32>
    %15 = arith.maximumf %13, %14 : vector<16x256xf32>
    %16 = arith.truncf %15 : vector<16x256xf32> to vector<16x256xbf16>
    %c0_12 = arith.constant 0 : index
    %c0_13 = arith.constant 0 : index
    %17 = vector.load %arg6[%c0_12, %c0_13] : memref<256x128xbf16, #tpu.memory_space<vmem>>, vector<256x128xbf16>
    %cst_14 = arith.constant dense<0.000000e+00> : vector<16x128xf32>
    %18 = tpu.matmul %16, %17, %cst_14 {dimension_numbers = #tpu.dot_dimension_numbers<[1], [0], [0], [1], [0, 0, 1, 1], [], []>} : vector<16x256xbf16>, vector<256x128xbf16>, vector<16x128xf32> -> vector<16x128xf32>
    %c0_15 = arith.constant 0 : index
    %c0_16 = arith.constant 0 : index
    %19 = vector.load %arg7[%c0_15, %c0_16] : memref<1x128xf32, #tpu.memory_space<vmem>>, vector<1x128xf32>
    %20 = vector.broadcast %19 : vector<1x128xf32> to vector<16x128xf32>
    %21 = arith.addf %18, %20 : vector<16x128xf32>
    %c0_17 = arith.constant 0 : index
    %c0_18 = arith.constant 0 : index
    %22 = vector.load %arg8[%c0_17, %c0_18] : memref<16x128xf32, #tpu.memory_space<vmem>>, vector<16x128xf32>
    tpu.vector_store %arg8[%c0_17, %c0_18], %21 {strides = array<i32>} : memref<16x128xf32, #tpu.memory_space<vmem>>, vector<16x128xf32>,
    return
  }
  func.func @transform_0(%arg0: i32) -> (i32, i32) {
    %c0_i32 = arith.constant 0 : i32
    %c0_i32_0 = arith.constant 0 : i32
    return %arg0, %c0_i32 : i32, i32
  }
  func.func @transform_1(%arg0: i32) -> (i32, i32) {
    %c0_i32 = arith.constant 0 : i32
    %c0_i32_0 = arith.constant 0 : i32
    %c0_i32_1 = arith.constant 0 : i32
    return %c0_i32, %c0_i32_0 : i32, i32
  }
  func.func @transform_2(%arg0: i32) -> (i32, i32) {
    %c0_i32 = arith.constant 0 : i32
    %c0_i32_0 = arith.constant 0 : i32
    %c0_i32_1 = arith.constant 0 : i32
    return %c0_i32, %c0_i32_0 : i32, i32
  }
  func.func @transform_3(%arg0: i32) -> (i32, i32) {
    %c0_i32 = arith.constant 0 : i32
    %c0_i32_0 = arith.constant 0 : i32
    %c0_i32_1 = arith.constant 0 : i32
    return %c0_i32, %c0_i32_0 : i32, i32
  }
  func.func @transform_4(%arg0: i32) -> (i32, i32) {
    %c0_i32 = arith.constant 0 : i32
    %c0_i32_0 = arith.constant 0 : i32
    %c0_i32_1 = arith.constant 0 : i32
    return %c0_i32, %c0_i32_0 : i32, i32
  }
  func.func @transform_5(%arg0: i32) -> (i32, i32) {
    %c0_i32 = arith.constant 0 : i32
    %c0_i32_0 = arith.constant 0 : i32
    %c0_i32_1 = arith.constant 0 : i32
    return %c0_i32, %c0_i32_0 : i32, i32
  }
  func.func @transform_6(%arg0: i32) -> (i32, i32) {
    %c0_i32 = arith.constant 0 : i32
    %c0_i32_0 = arith.constant 0 : i32
    %c0_i32_1 = arith.constant 0 : i32
    return %c0_i32, %c0_i32_0 : i32, i32
  }
  func.func @transform_7(%arg0: i32) -> (i32, i32) {
    %c0_i32 = arith.constant 0 : i32
    %c0_i32_0 = arith.constant 0 : i32
    return %arg0, %c0_i32 : i32, i32
  }
}

</mosaic_0001>

<llo_original>
// kernel: tpu_custom_call.1
$region0: #{tpu_custom_call.1}
  #allocation0 [shape = 'u32[]', space=smem, size = 0x4, offset = 0x4, fixed_abs, tag = 'smem constant byte address 0x4 - core index']
  #allocation1 [shape = 'u32[144,128]{1,0:T(1,128)}', space=vmem, size = 0x12000, scoped, tag = 'internal scratch']
  %s0 = inlined_call_operand.hbm [shape: bf16[2,1024], index: 0, kind: input, shape index: {}]
  %s1 = inlined_call_operand.hbm [shape: bf16[1024,512], index: 1, kind: input, shape index: {}]
  %s2 = inlined_call_operand.vmem [shape: f32[1,512], index: 2, kind: input, shape index: {}]
  %s3 = inlined_call_operand.hbm [shape: bf16[512,256], index: 3, kind: input, shape index: {}]
  %s4 = inlined_call_operand.vmem [shape: f32[1,256], index: 4, kind: input, shape index: {}]
  %s5 = inlined_call_operand.hbm [shape: bf16[256,128], index: 5, kind: input, shape index: {}]
  %s6 = inlined_call_operand.vmem [shape: f32[1,128], index: 6, kind: input, shape index: {}]
  %s7 = inlined_call_operand.hbm [shape: f32[16,128], index: 7, kind: output, shape index: {}]
  %s8 = sld [smem:[#allocation0]]
  $region54: #{tpu_custom_call.1} parent=0
    _
  %s10 = ssub.s32 1, %s8
  %s11 = scalar_select 0, %s10, %s8
  $region1: #{tpu_custom_call.1} parent=0
    #allocation2 [shape = 'u8[32768]{0}', space=vmem, size = 0x8000, scoped, tag = 'input window, operand 0, single buffered']
    #allocation3 [shape = 's32[1]{0}', space=sflag, size = 0x4, scoped, tag = 'scoped memory for tpu_custom_call.1']
    #allocation4 [shape = 's32[1]{0}', space=sflag, size = 0x4, scoped, tag = 'scoped memory for tpu_custom_call.1']
    #allocation5 [shape = 'u8[1048576]{0}', space=vmem, size = 0x100000, scoped, tag = 'input window, operand 1, single buffered']
    #allocation6 [shape = 's32[1]{0}', space=sflag, size = 0x4, scoped, tag = 'scoped memory for tpu_custom_call.1']
    #allocation7 [shape = 'u8[262144]{0}', space=vmem, size = 0x40000, scoped, tag = 'input window, operand 3, single buffered']
    #allocation8 [shape = 'u8[65536]{0}', space=vmem, size = 0x10000, scoped, tag = 'input window, operand 5, single buffered']
    #allocation9 [shape = 's32[1]{0}', space=sflag, size = 0x4, scoped, tag = 'scoped memory for tpu_custom_call.1']
    #allocation10 [shape = 'u8[8192]{0}', space=vmem, size = 0x2000, scoped, tag = 'output window, operand 0, single buffered']
    %12 = vsyncpa [#allocation3], 0
    %13 = vsyncpa [#allocation6], 0
    %14 = vsyncpa [#allocation9], 0
    %15 = vsyncpa [#allocation4], 0
    // Predicated region
    $region2: #{tpu_custom_call.1} parent=1 // pred_check
      _
    $region3: #{tpu_custom_call.1} parent=1 // pred_check_branch
      %17 = sbr.rel (0) target = $region5
    $region4: #{tpu_custom_call.1} parent=1 // pred_region
      %s19 = ssub.s32 1024, 128
      %20 = vsyncadd [#allocation3], %s19
      %s21 = sshll.u32 [#allocation2], 4
      %s22 = int_to_ptr.vmem [resolvable:$true] %s21
      %27 = dma.hbm_to_vmem [thread:$0]  %s0, 128, %s22, [#allocation3], 128, 128, 8
    $region5: #{tpu_custom_call.1} parent=1 // pred_fallthru
      _
    // Predicated region
    $region6: #{tpu_custom_call.1} parent=1 // pred_check
      _
    $region7: #{tpu_custom_call.1} parent=1 // pred_check_branch
      %29 = sbr.rel (0) target = $region9
    $region8: #{tpu_custom_call.1} parent=1 // pred_region
      %s31 = ssub.s32 32768, 32768
      %32 = vsyncadd [#allocation6], %s31
      %s33 = sshll.u32 [#allocation5], 4
      %s34 = int_to_ptr.vmem [resolvable:$true] %s33
      %39 = dma.hbm_to_vmem [thread:$0]  %s1, 32768, %s34, [#allocation6], 256, 256, 16
    $region9: #{tpu_custom_call.1} parent=1 // pred_fallthru
      _
    // Predicated region
    $region10: #{tpu_custom_call.1} parent=1 // pred_check
      _
    $region11: #{tpu_custom_call.1} parent=1 // pred_check_branch
      %41 = sbr.rel (0) target = $region13
    $region12: #{tpu_custom_call.1} parent=1 // pred_region
      _
    $region13: #{tpu_custom_call.1} parent=1 // pred_fallthru
      _
    // Predicated region
    $region14: #{tpu_custom_call.1} parent=1 // pred_check
      _
    $region15: #{tpu_custom_call.1} parent=1 // pred_check_branch
      %43 = sbr.rel (0) target = $region17
    $region16: #{tpu_custom_call.1} parent=1 // pred_region
      %s45 = ssub.s32 8192, 8192
      %46 = vsyncadd [#allocation6], %s45
      %s47 = sshll.u32 [#allocation7], 4
      %s48 = int_to_ptr.vmem [resolvable:$true] %s47
      %53 = dma.hbm_to_vmem [thread:$0]  %s3, 8192, %s48, [#allocation6], 128, 128, 8
    $region17: #{tpu_custom_call.1} parent=1 // pred_fallthru
      _
    // Predicated region
    $region18: #{tpu_custom_call.1} parent=1 // pred_check
      _
    $region19: #{tpu_custom_call.1} parent=1 // pred_check_branch
      %55 = sbr.rel (0) target = $region21
    $region20: #{tpu_custom_call.1} parent=1 // pred_region
      _
    $region21: #{tpu_custom_call.1} parent=1 // pred_fallthru
      _
    // Predicated region
    $region22: #{tpu_custom_call.1} parent=1 // pred_check
      _
    $region23: #{tpu_custom_call.1} parent=1 // pred_check_branch
      %57 = sbr.rel (0) target = $region25
    $region24: #{tpu_custom_call.1} parent=1 // pred_region
      %s59 = ssub.s32 2048, 2048
      %60 = vsyncadd [#allocation9], %s59
      %s61 = sshll.u32 [#allocation8], 4
      %s62 = int_to_ptr.vmem [resolvable:$true] %s61
      %67 = dma.hbm_to_vmem [thread:$0]  %s5, 2048, %s62, [#allocation9], 64, 64, 4
    $region25: #{tpu_custom_call.1} parent=1 // pred_fallthru
      _
    // Predicated region
    $region26: #{tpu_custom_call.1} parent=1 // pred_check
      _
    $region27: #{tpu_custom_call.1} parent=1 // pred_check_branch
      %69 = sbr.rel (0) target = $region29
    $region28: #{tpu_custom_call.1} parent=1 // pred_region
      _
    $region29: #{tpu_custom_call.1} parent=1 // pred_fallthru
      _
    // Predicated region
    $region30: #{tpu_custom_call.1} parent=1 // pred_check
      _
    $region31: #{tpu_custom_call.1} parent=1 // pred_check_branch
      %71 = sbr.rel (0) target = $region33
    $region32: #{tpu_custom_call.1} parent=1 // pred_region
      %72 = dma.done [#allocation3], 1024
    $region33: #{tpu_custom_call.1} parent=1 // pred_fallthru
      _
    // Predicated region
    $region34: #{tpu_custom_call.1} parent=1 // pred_check
      _
    $region35: #{tpu_custom_call.1} parent=1 // pred_check_branch
      %74 = sbr.rel (0) target = $region37
    $region36: #{tpu_custom_call.1} parent=1 // pred_region
      %75 = dma.done [#allocation6], 32768
    $region37: #{tpu_custom_call.1} parent=1 // pred_fallthru
      _
    // Predicated region
    $region38: #{tpu_custom_call.1} parent=1 // pred_check
      _
    $region39: #{tpu_custom_call.1} parent=1 // pred_check_branch
      %77 = sbr.rel (0) target = $region41
    $region40: #{tpu_custom_call.1} parent=1 // pred_region
      %78 = dma.done [#allocation6], 8192
    $region41: #{tpu_custom_call.1} parent=1 // pred_fallthru
      _
    // Predicated region
    $region42: #{tpu_custom_call.1} parent=1 // pred_check
      _
    $region43: #{tpu_custom_call.1} parent=1 // pred_check_branch
      %80 = sbr.rel (0) target = $region45
    $region44: #{tpu_custom_call.1} parent=1 // pred_region
      %81 = dma.done [#allocation9], 2048
    $region45: #{tpu_custom_call.1} parent=1 // pred_fallthru
      _
    %v83 = vld [vmem:[#allocation2] sm:$0xff]
    %v84 = vld [vmem:[#allocation2 + $0x8] sm:$0xff]
    %v85 = vld [vmem:[#allocation2 + $0x10] sm:$0xff]
    %v86 = vld [vmem:[#allocation2 + $0x18] sm:$0xff]
    %v87 = vld [vmem:[#allocation2 + $0x20] sm:$0xff]
    %v88 = vld [vmem:[#allocation2 + $0x28] sm:$0xff]
    %v89 = vld [vmem:[#allocation2 + $0x30] sm:$0xff]
    %v90 = vld [vmem:[#allocation2 + $0x38] sm:$0xff]
    %v91 = vld [vmem:[#allocation5] sm:$0xff]
    %v92 = vld [vmem:[#allocation5 + $0x8] sm:$0xff]
    %v93 = vld [vmem:[#allocation5 + $0x10] sm:$0xff]
    %v94 = vld [vmem:[#allocation5 + $0x18] sm:$0xff]
    %v95 = vld [vmem:[#allocation5 + $0x20] sm:$0xff]
    %v96 = vld [vmem:[#allocation5 + $0x28] sm:$0xff]
    %v97 = vld [vmem:[#allocation5 + $0x30] sm:$0xff]
    %v98 = vld [vmem:[#allocation5 + $0x38] sm:$0xff]
    %v99 = vld [vmem:[#allocation5 + $0x40] sm:$0xff]
    %v100 = vld [vmem:[#allocation5 + $0x48] sm:$0xff]
    %v101 = vld [vmem:[#allocation5 + $0x50] sm:$0xff]
    %v102 = vld [vmem:[#allocation5 + $0x58] sm:$0xff]
    %v103 = vld [vmem:[#allocation5 + $0x60] sm:$0xff]
    %v104 = vld [vmem:[#allocation5 + $0x68] sm:$0xff]
    %v105 = vld [vmem:[#allocation5 + $0x70] sm:$0xff]
    %v106 = vld [vmem:[#allocation5 + $0x78] sm:$0xff]
    %v107 = vld [vmem:[#allocation5 + $0x80] sm:$0xff]
    %v108 = vld [vmem:[#allocation5 + $0x88] sm:$0xff]
    %v109 = vld [vmem:[#allocation5 + $0x90] sm:$0xff]
    %v110 = vld [vmem:[#allocation5 + $0x98] sm:$0xff]
    %v111 = vld [vmem:[#allocation5 + $0xa0] sm:$0xff]
    %v112 = vld [vmem:[#allocation5 + $0xa8] sm:$0xff]
    %v113 = vld [vmem:[#allocation5 + $0xb0] sm:$0xff]
    %v114 = vld [vmem:[#allocation5 + $0xb8] sm:$0xff]
    %v115 = vld [vmem:[#allocation5 + $0xc0] sm:$0xff]
    %v116 = vld [vmem:[#allocation5 + $0xc8] sm:$0xff]
    %v117 = vld [vmem:[#allocation5 + $0xd0] sm:$0xff]
    %v118 = vld [vmem:[#allocation5 + $0xd8] sm:$0xff]
    %v119 = vld [vmem:[#allocation5 + $0xe0] sm:$0xff]
    %v120 = vld [vmem:[#allocation5 + $0xe8] sm:$0xff]
    %v121 = vld [vmem:[#allocation5 + $0xf0] sm:$0xff]
    %v122 = vld [vmem:[#allocation5 + $0xf8] sm:$0xff]
    %v123 = vld [vmem:[#allocation5 + $0x100] sm:$0xff]
    %v124 = vld [vmem:[#allocation5 + $0x108] sm:$0xff]
    %v125 = vld [vmem:[#allocation5 + $0x110] sm:$0xff]
    %v126 = vld [vmem:[#allocation5 + $0x118] sm:$0xff]
    %v127 = vld [vmem:[#allocation5 + $0x120] sm:$0xff]
    %v128 = vld [vmem:[#allocation5 + $0x128] sm:$0xff]
    %v129 = vld [vmem:[#allocation5 + $0x130] sm:$0xff]
    %v130 = vld [vmem:[#allocation5 + $0x138] sm:$0xff]
    %v131 = vld [vmem:[#allocation5 + $0x140] sm:$0xff]
    %v132 = vld [vmem:[#allocation5 + $0x148] sm:$0xff]
    %v133 = vld [vmem:[#allocation5 + $0x150] sm:$0xff]
    %v134 = vld [vmem:[#allocation5 + $0x158] sm:$0xff]
    %v135 = vld [vmem:[#allocation5 + $0x160] sm:$0xff]
    %v136 = vld [vmem:[#allocation5 + $0x168] sm:$0xff]
    %v137 = vld [vmem:[#allocation5 + $0x170] sm:$0xff]
    %v138 = vld [vmem:[#allocation5 + $0x178] sm:$0xff]
    %v139 = vld [vmem:[#allocation5 + $0x180] sm:$0xff]
    %v140 = vld [vmem:[#allocation5 + $0x188] sm:$0xff]
    %v141 = vld [vmem:[#allocation5 + $0x190] sm:$0xff]
    %v142 = vld [vmem:[#allocation5 + $0x198] sm:$0xff]
    %v143 = vld [vmem:[#allocation5 + $0x1a0] sm:$0xff]
    %v144 = vld [vmem:[#allocation5 + $0x1a8] sm:$0xff]
    %v145 = vld [vmem:[#allocation5 + $0x1b0] sm:$0xff]
    %v146 = vld [vmem:[#allocation5 + $0x1b8] sm:$0xff]
    %v147 = vld [vmem:[#allocation5 + $0x1c0] sm:$0xff]
    %v148 = vld [vmem:[#allocation5 + $0x1c8] sm:$0xff]
    %v149 = vld [vmem:[#allocation5 + $0x1d0] sm:$0xff]
    %v150 = vld [vmem:[#allocation5 + $0x1d8] sm:$0xff]
    %v151 = vld [vmem:[#allocation5 + $0x1e0] sm:$0xff]
    %v152 = vld [vmem:[#allocation5 + $0x1e8] sm:$0xff]
    %v153 = vld [vmem:[#allocation5 + $0x1f0] sm:$0xff]
    %v154 = vld [vmem:[#allocation5 + $0x1f8] sm:$0xff]
    %v155 = vld [vmem:[#allocation5 + $0x200] sm:$0xff]
    %v156 = vld [vmem:[#allocation5 + $0x208] sm:$0xff]
    %v157 = vld [vmem:[#allocation5 + $0x210] sm:$0xff]
    %v158 = vld [vmem:[#allocation5 + $0x218] sm:$0xff]
    %v159 = vld [vmem:[#allocation5 + $0x220] sm:$0xff]
    %v160 = vld [vmem:[#allocation5 + $0x228] sm:$0xff]
    %v161 = vld [vmem:[#allocation5 + $0x230] sm:$0xff]
    %v162 = vld [vmem:[#allocation5 + $0x238] sm:$0xff]
    %v163 = vld [vmem:[#allocation5 + $0x240] sm:$0xff]
    %v164 = vld [vmem:[#allocation5 + $0x248] sm:$0xff]
    %v165 = vld [vmem:[#allocation5 + $0x250] sm:$0xff]
    %v166 = vld [vmem:[#allocation5 + $0x258] sm:$0xff]
    %v167 = vld [vmem:[#allocation5 + $0x260] sm:$0xff]
    %v168 = vld [vmem:[#allocation5 + $0x268] sm:$0xff]
    %v169 = vld [vmem:[#allocation5 + $0x270] sm:$0xff]
    %v170 = vld [vmem:[#allocation5 + $0x278] sm:$0xff]
    %v171 = vld [vmem:[#allocation5 + $0x280] sm:$0xff]
    %v172 = vld [vmem:[#allocation5 + $0x288] sm:$0xff]
    %v173 = vld [vmem:[#allocation5 + $0x290] sm:$0xff]
    %v174 = vld [vmem:[#allocation5 + $0x298] sm:$0xff]
    %v175 = vld [vmem:[#allocation5 + $0x2a0] sm:$0xff]
    %v176 = vld [vmem:[#allocation5 + $0x2a8] sm:$0xff]
    %v177 = vld [vmem:[#allocation5 + $0x2b0] sm:$0xff]
    %v178 = vld [vmem:[#allocation5 + $0x2b8] sm:$0xff]
    %v179 = vld [vmem:[#allocation5 + $0x2c0] sm:$0xff]
    %v180 = vld [vmem:[#allocation5 + $0x2c8] sm:$0xff]
    %v181 = vld [vmem:[#allocation5 + $0x2d0] sm:$0xff]
    %v182 = vld [vmem:[#allocation5 + $0x2d8] sm:$0xff]
    %v183 = vld [vmem:[#allocation5 + $0x2e0] sm:$0xff]
    %v184 = vld [vmem:[#allocation5 + $0x2e8] sm:$0xff]
    %v185 = vld [vmem:[#allocation5 + $0x2f0] sm:$0xff]
    %v186 = vld [vmem:[#allocation5 + $0x2f8] sm:$0xff]
    %v187 = vld [vmem:[#allocation5 + $0x300] sm:$0xff]
    %v188 = vld [vmem:[#allocation5 + $0x308] sm:$0xff]
    %v189 = vld [vmem:[#allocation5 + $0x310] sm:$0xff]
    %v190 = vld [vmem:[#allocation5 + $0x318] sm:$0xff]
    %v191 = vld [vmem:[#allocation5 + $0x320] sm:$0xff]
    %v192 = vld [vmem:[#allocation5 + $0x328] sm:$0xff]
    %v193 = vld [vmem:[#allocation5 + $0x330] sm:$0xff]
    %v194 = vld [vmem:[#allocation5 + $0x338] sm:$0xff]
    %v195 = vld [vmem:[#allocation5 + $0x340] sm:$0xff]
    %v196 = vld [vmem:[#allocation5 + $0x348] sm:$0xff]
    %v197 = vld [vmem:[#allocation5 + $0x350] sm:$0xff]
    %v198 = vld [vmem:[#allocation5 + $0x358] sm:$0xff]
    %v199 = vld [vmem:[#allocation5 + $0x360] sm:$0xff]
    %v200 = vld [vmem:[#allocation5 + $0x368] sm:$0xff]
    %v201 = vld [vmem:[#allocation5 + $0x370] sm:$0xff]
    %v202 = vld [vmem:[#allocation5 + $0x378] sm:$0xff]
    %v203 = vld [vmem:[#allocation5 + $0x380] sm:$0xff]
    %v204 = vld [vmem:[#allocation5 + $0x388] sm:$0xff]
    %v205 = vld [vmem:[#allocation5 + $0x390] sm:$0xff]
    %v206 = vld [vmem:[#allocation5 + $0x398] sm:$0xff]
    %v207 = vld [vmem:[#allocation5 + $0x3a0] sm:$0xff]
    %v208 = vld [vmem:[#allocation5 + $0x3a8] sm:$0xff]
    %v209 = vld [vmem:[#allocation5 + $0x3b0] sm:$0xff]
    %v210 = vld [vmem:[#allocation5 + $0x3b8] sm:$0xff]
    %v211 = vld [vmem:[#allocation5 + $0x3c0] sm:$0xff]
    %v212 = vld [vmem:[#allocation5 + $0x3c8] sm:$0xff]
    %v213 = vld [vmem:[#allocation5 + $0x3d0] sm:$0xff]
    %v214 = vld [vmem:[#allocation5 + $0x3d8] sm:$0xff]
    %v215 = vld [vmem:[#allocation5 + $0x3e0] sm:$0xff]
    %v216 = vld [vmem:[#allocation5 + $0x3e8] sm:$0xff]
    %v217 = vld [vmem:[#allocation5 + $0x3f0] sm:$0xff]
    %v218 = vld [vmem:[#allocation5 + $0x3f8] sm:$0xff]
    %v219 = vld [vmem:[#allocation5 + $0x400] sm:$0xff]
    %v220 = vld [vmem:[#allocation5 + $0x408] sm:$0xff]
    %v221 = vld [vmem:[#allocation5 + $0x410] sm:$0xff]
    %v222 = vld [vmem:[#allocation5 + $0x418] sm:$0xff]
    %v223 = vld [vmem:[#allocation5 + $0x420] sm:$0xff]
    %v224 = vld [vmem:[#allocation5 + $0x428] sm:$0xff]
    %v225 = vld [vmem:[#allocation5 + $0x430] sm:$0xff]
    %v226 = vld [vmem:[#allocation5 + $0x438] sm:$0xff]
    %v227 = vld [vmem:[#allocation5 + $0x440] sm:$0xff]
    %v228 = vld [vmem:[#allocation5 + $0x448] sm:$0xff]
    %v229 = vld [vmem:[#allocation5 + $0x450] sm:$0xff]
    %v230 = vld [vmem:[#allocation5 + $0x458] sm:$0xff]
    %v231 = vld [vmem:[#allocation5 + $0x460] sm:$0xff]
    %v232 = vld [vmem:[#allocation5 + $0x468] sm:$0xff]
    %v233 = vld [vmem:[#allocation5 + $0x470] sm:$0xff]
    %v234 = vld [vmem:[#allocation5 + $0x478] sm:$0xff]
    %v235 = vld [vmem:[#allocation5 + $0x480] sm:$0xff]
    %v236 = vld [vmem:[#allocation5 + $0x488] sm:$0xff]
    %v237 = vld [vmem:[#allocation5 + $0x490] sm:$0xff]
    %v238 = vld [vmem:[#allocation5 + $0x498] sm:$0xff]
    %v239 = vld [vmem:[#allocation5 + $0x4a0] sm:$0xff]
    %v240 = vld [vmem:[#allocation5 + $0x4a8] sm:$0xff]
    %v241 = vld [vmem:[#allocation5 + $0x4b0] sm:$0xff]
    %v242 = vld [vmem:[#allocation5 + $0x4b8] sm:$0xff]
    %v243 = vld [vmem:[#allocation5 + $0x4c0] sm:$0xff]
    %v244 = vld [vmem:[#allocation5 + $0x4c8] sm:$0xff]
    %v245 = vld [vmem:[#allocation5 + $0x4d0] sm:$0xff]
    %v246 = vld [vmem:[#allocation5 + $0x4d8] sm:$0xff]
    %v247 = vld [vmem:[#allocation5 + $0x4e0] sm:$0xff]
    %v248 = vld [vmem:[#allocation5 + $0x4e8] sm:$0xff]
    %v249 = vld [vmem:[#allocation5 + $0x4f0] sm:$0xff]
    %v250 = vld [vmem:[#allocation5 + $0x4f8] sm:$0xff]
    %v251 = vld [vmem:[#allocation5 + $0x500] sm:$0xff]
    %v252 = vld [vmem:[#allocation5 + $0x508] sm:$0xff]
    %v253 = vld [vmem:[#allocation5 + $0x510] sm:$0xff]
    %v254 = vld [vmem:[#allocation5 + $0x518] sm:$0xff]
    %v255 = vld [vmem:[#allocation5 + $0x520] sm:$0xff]
    %v256 = vld [vmem:[#allocation5 + $0x528] sm:$0xff]
    %v257 = vld [vmem:[#allocation5 + $0x530] sm:$0xff]
    %v258 = vld [vmem:[#allocation5 + $0x538] sm:$0xff]
    %v259 = vld [vmem:[#allocation5 + $0x540] sm:$0xff]
    %v260 = vld [vmem:[#allocation5 + $0x548] sm:$0xff]
    %v261 = vld [vmem:[#allocation5 + $0x550] sm:$0xff]
    %v262 = vld [vmem:[#allocation5 + $0x558] sm:$0xff]
    %v263 = vld [vmem:[#allocation5 + $0x560] sm:$0xff]
    %v264 = vld [vmem:[#allocation5 + $0x568] sm:$0xff]
    %v265 = vld [vmem:[#allocation5 + $0x570] sm:$0xff]
    %v266 = vld [vmem:[#allocation5 + $0x578] sm:$0xff]
    %v267 = vld [vmem:[#allocation5 + $0x580] sm:$0xff]
    %v268 = vld [vmem:[#allocation5 + $0x588] sm:$0xff]
    %v269 = vld [vmem:[#allocation5 + $0x590] sm:$0xff]
    %v270 = vld [vmem:[#allocation5 + $0x598] sm:$0xff]
    %v271 = vld [vmem:[#allocation5 + $0x5a0] sm:$0xff]
    %v272 = vld [vmem:[#allocation5 + $0x5a8] sm:$0xff]
    %v273 = vld [vmem:[#allocation5 + $0x5b0] sm:$0xff]
    %v274 = vld [vmem:[#allocation5 + $0x5b8] sm:$0xff]
    %v275 = vld [vmem:[#allocation5 + $0x5c0] sm:$0xff]
    %v276 = vld [vmem:[#allocation5 + $0x5c8] sm:$0xff]
    %v277 = vld [vmem:[#allocation5 + $0x5d0] sm:$0xff]
    %v278 = vld [vmem:[#allocation5 + $0x5d8] sm:$0xff]
    %v279 = vld [vmem:[#allocation5 + $0x5e0] sm:$0xff]
    %v280 = vld [vmem:[#allocation5 + $0x5e8] sm:$0xff]
    %v281 = vld [vmem:[#allocation5 + $0x5f0] sm:$0xff]
    %v282 = vld [vmem:[#allocation5 + $0x5f8] sm:$0xff]
    %v283 = vld [vmem:[#allocation5 + $0x600] sm:$0xff]
    %v284 = vld [vmem:[#allocation5 + $0x608] sm:$0xff]
    %v285 = vld [vmem:[#allocation5 + $0x610] sm:$0xff]
    %v286 = vld [vmem:[#allocation5 + $0x618] sm:$0xff]
    %v287 = vld [vmem:[#allocation5 + $0x620] sm:$0xff]
    %v288 = vld [vmem:[#allocation5 + $0x628] sm:$0xff]
    %v289 = vld [vmem:[#allocation5 + $0x630] sm:$0xff]
    %v290 = vld [vmem:[#allocation5 + $0x638] sm:$0xff]
    %v291 = vld [vmem:[#allocation5 + $0x640] sm:$0xff]
    %v292 = vld [vmem:[#allocation5 + $0x648] sm:$0xff]
    %v293 = vld [vmem:[#allocation5 + $0x650] sm:$0xff]
    %v294 = vld [vmem:[#allocation5 + $0x658] sm:$0xff]
    %v295 = vld [vmem:[#allocation5 + $0x660] sm:$0xff]
    %v296 = vld [vmem:[#allocation5 + $0x668] sm:$0xff]
    %v297 = vld [vmem:[#allocation5 + $0x670] sm:$0xff]
    %v298 = vld [vmem:[#allocation5 + $0x678] sm:$0xff]
    %v299 = vld [vmem:[#allocation5 + $0x680] sm:$0xff]
    %v300 = vld [vmem:[#allocation5 + $0x688] sm:$0xff]
    %v301 = vld [vmem:[#allocation5 + $0x690] sm:$0xff]
    %v302 = vld [vmem:[#allocation5 + $0x698] sm:$0xff]
    %v303 = vld [vmem:[#allocation5 + $0x6a0] sm:$0xff]
    %v304 = vld [vmem:[#allocation5 + $0x6a8] sm:$0xff]
    %v305 = vld [vmem:[#allocation5 + $0x6b0] sm:$0xff]
    %v306 = vld [vmem:[#allocation5 + $0x6b8] sm:$0xff]
    %v307 = vld [vmem:[#allocation5 + $0x6c0] sm:$0xff]
    %v308 = vld [vmem:[#allocation5 + $0x6c8] sm:$0xff]
    %v309 = vld [vmem:[#allocation5 + $0x6d0] sm:$0xff]
    %v310 = vld [vmem:[#allocation5 + $0x6d8] sm:$0xff]
    %v311 = vld [vmem:[#allocation5 + $0x6e0] sm:$0xff]
    %v312 = vld [vmem:[#allocation5 + $0x6e8] sm:$0xff]
    %v313 = vld [vmem:[#allocation5 + $0x6f0] sm:$0xff]
    %v314 = vld [vmem:[#allocation5 + $0x6f8] sm:$0xff]
    %v315 = vld [vmem:[#allocation5 + $0x700] sm:$0xff]
    %v316 = vld [vmem:[#allocation5 + $0x708] sm:$0xff]
    %v317 = vld [vmem:[#allocation5 + $0x710] sm:$0xff]
    %v318 = vld [vmem:[#allocation5 + $0x718] sm:$0xff]
    %v319 = vld [vmem:[#allocation5 + $0x720] sm:$0xff]
    %v320 = vld [vmem:[#allocation5 + $0x728] sm:$0xff]
    %v321 = vld [vmem:[#allocation5 + $0x730] sm:$0xff]
    %v322 = vld [vmem:[#allocation5 + $0x738] sm:$0xff]
    %v323 = vld [vmem:[#allocation5 + $0x740] sm:$0xff]
    %v324 = vld [vmem:[#allocation5 + $0x748] sm:$0xff]
    %v325 = vld [vmem:[#allocation5 + $0x750] sm:$0xff]
    %v326 = vld [vmem:[#allocation5 + $0x758] sm:$0xff]
    %v327 = vld [vmem:[#allocation5 + $0x760] sm:$0xff]
    %v328 = vld [vmem:[#allocation5 + $0x768] sm:$0xff]
    %v329 = vld [vmem:[#allocation5 + $0x770] sm:$0xff]
    %v330 = vld [vmem:[#allocation5 + $0x778] sm:$0xff]
    %v331 = vld [vmem:[#allocation5 + $0x780] sm:$0xff]
    %v332 = vld [vmem:[#allocation5 + $0x788] sm:$0xff]
    %v333 = vld [vmem:[#allocation5 + $0x790] sm:$0xff]
    %v334 = vld [vmem:[#allocation5 + $0x798] sm:$0xff]
    %v335 = vld [vmem:[#allocation5 + $0x7a0] sm:$0xff]
    %v336 = vld [vmem:[#allocation5 + $0x7a8] sm:$0xff]
    %v337 = vld [vmem:[#allocation5 + $0x7b0] sm:$0xff]
    %v338 = vld [vmem:[#allocation5 + $0x7b8] sm:$0xff]
    %v339 = vld [vmem:[#allocation5 + $0x7c0] sm:$0xff]
    %v340 = vld [vmem:[#allocation5 + $0x7c8] sm:$0xff]
    %v341 = vld [vmem:[#allocation5 + $0x7d0] sm:$0xff]
    %v342 = vld [vmem:[#allocation5 + $0x7d8] sm:$0xff]
    %v343 = vld [vmem:[#allocation5 + $0x7e0] sm:$0xff]
    %v344 = vld [vmem:[#allocation5 + $0x7e8] sm:$0xff]
    %v345 = vld [vmem:[#allocation5 + $0x7f0] sm:$0xff]
    %v346 = vld [vmem:[#allocation5 + $0x7f8] sm:$0xff]
    %v347 = vld [vmem:[%s2] sm:$0xf]
    %v349 = vlaneseq
    %v350 = vshrl.u32 %v349, 7
    %v351 = vsub.s32 0, %v350
    %v352 = vrot.slane %v347, %v351
    %v353 = vlaneseq
    %v354 = vshrl.u32 %v353, 7
    %v355 = vsub.s32 1, %v354
    %v356 = vrot.slane %v347, %v355
    %v357 = vlaneseq
    %v358 = vshrl.u32 %v357, 7
    %v359 = vsub.s32 2, %v358
    %v360 = vrot.slane %v347, %v359
    %v361 = vlaneseq
    %v362 = vshrl.u32 %v361, 7
    %v363 = vsub.s32 3, %v362
    %v364 = vrot.slane %v347, %v363
    %v377 = vcombine.low %v83, %v84
    %v378 = vcombine.high %v83, %v84
    %v379 = vcombine.low %v85, %v86
    %v380 = vcombine.high %v85, %v86
    %v381 = vcombine.low %v87, %v88
    %v382 = vcombine.high %v87, %v88
    %v383 = vcombine.low %v89, %v90
    %v384 = vcombine.high %v89, %v90
    %v386 = vunpack.c.l.s4 1966171168
    %v387 = vunpack.c.0.s8 %v386
    %v388 = vlaneseq
    %v389 = vshrl.u32 %v388, 7
    %v390 = vsub.s32 %v387, %v389
    %v391 = vrot.slane %v377, %v390
    %v393 = vunpack.c.l.s4 1966171168
    %v394 = vunpack.c.0.s8 %v393
    %v395 = vlaneseq
    %v396 = vshrl.u32 %v395, 7
    %v397 = vsub.s32 %v394, %v396
    %v398 = vrot.slane %v378, %v397
    %v400 = vunpack.c.l.s4 1966171168
    %v401 = vunpack.c.0.s8 %v400
    %v402 = vlaneseq
    %v403 = vshrl.u32 %v402, 7
    %v404 = vsub.s32 %v401, %v403
    %v405 = vrot.slane %v379, %v404
    %v407 = vunpack.c.l.s4 1966171168
    %v408 = vunpack.c.0.s8 %v407
    %v409 = vlaneseq
    %v410 = vshrl.u32 %v409, 7
    %v411 = vsub.s32 %v408, %v410
    %v412 = vrot.slane %v380, %v411
    %v414 = vunpack.c.l.s4 1966171168
    %v415 = vunpack.c.0.s8 %v414
    %v416 = vlaneseq
    %v417 = vshrl.u32 %v416, 7
    %v418 = vsub.s32 %v415, %v417
    %v419 = vrot.slane %v381, %v418
    %v421 = vunpack.c.l.s4 1966171168
    %v422 = vunpack.c.0.s8 %v421
    %v423 = vlaneseq
    %v424 = vshrl.u32 %v423, 7
    %v425 = vsub.s32 %v422, %v424
    %v426 = vrot.slane %v382, %v425
    %v428 = vunpack.c.l.s4 1966171168
    %v429 = vunpack.c.0.s8 %v428
    %v430 = vlaneseq
    %v431 = vshrl.u32 %v430, 7
    %v432 = vsub.s32 %v429, %v431
    %v433 = vrot.slane %v383, %v432
    %v435 = vunpack.c.l.s4 1966171168
    %v436 = vunpack.c.0.s8 %v435
    %v437 = vlaneseq
    %v438 = vshrl.u32 %v437, 7
    %v439 = vsub.s32 %v436, %v438
    %v440 = vrot.slane %v384, %v439
    %v441 = vcombine.low %v391, %v405
    %v442 = vcombine.high %v391, %v405
    %v443 = vcombine.low %v398, %v412
    %v444 = vcombine.high %v398, %v412
    %v445 = vcombine.low %v419, %v433
    %v446 = vcombine.high %v419, %v433
    %v447 = vcombine.low %v426, %v440
    %v448 = vcombine.high %v426, %v440
    %v450 = vunpack.c.l.s4 1966171168
    %v451 = vunpack.c.0.s8 %v450
    %v452 = vlaneseq
    %v453 = vshrl.u32 %v452, 7
    %v454 = vsub.s32 %v451, %v453
    %v455 = vrot.slane %v441, %v454
    %v457 = vunpack.c.l.s4 1966171168
    %v458 = vunpack.c.0.s8 %v457
    %v459 = vlaneseq
    %v460 = vshrl.u32 %v459, 7
    %v461 = vsub.s32 %v458, %v460
    %v462 = vrot.slane %v443, %v461
    %v464 = vunpack.c.l.s4 1966171168
    %v465 = vunpack.c.0.s8 %v464
    %v466 = vlaneseq
    %v467 = vshrl.u32 %v466, 7
    %v468 = vsub.s32 %v465, %v467
    %v469 = vrot.slane %v442, %v468
    %v471 = vunpack.c.l.s4 1966171168
    %v472 = vunpack.c.0.s8 %v471
    %v473 = vlaneseq
    %v474 = vshrl.u32 %v473, 7
    %v475 = vsub.s32 %v472, %v474
    %v476 = vrot.slane %v444, %v475
    %v478 = vunpack.c.l.s4 1966171168
    %v479 = vunpack.c.0.s8 %v478
    %v480 = vlaneseq
    %v481 = vshrl.u32 %v480, 7
    %v482 = vsub.s32 %v479, %v481
    %v483 = vrot.slane %v445, %v482
    %v485 = vunpack.c.l.s4 1966171168
    %v486 = vunpack.c.0.s8 %v485
    %v487 = vlaneseq
    %v488 = vshrl.u32 %v487, 7
    %v489 = vsub.s32 %v486, %v488
    %v490 = vrot.slane %v447, %v489
    %v492 = vunpack.c.l.s4 1966171168
    %v493 = vunpack.c.0.s8 %v492
    %v494 = vlaneseq
    %v495 = vshrl.u32 %v494, 7
    %v496 = vsub.s32 %v493, %v495
    %v497 = vrot.slane %v446, %v496
    %v499 = vunpack.c.l.s4 1966171168
    %v500 = vunpack.c.0.s8 %v499
    %v501 = vlaneseq
    %v502 = vshrl.u32 %v501, 7
    %v503 = vsub.s32 %v500, %v502
    %v504 = vrot.slane %v448, %v503
    %v505 = vcombine.low %v455, %v483
    %v506 = vcombine.high %v455, %v483
    %v507 = vcombine.low %v462, %v490
    %v508 = vcombine.high %v462, %v490
    %v509 = vcombine.low %v469, %v497
    %v510 = vcombine.high %v469, %v497
    %v511 = vcombine.low %v476, %v504
    %v512 = vcombine.high %v476, %v504
    %v777 = vunpack.c.l.b16 %v91
    %v778 = vunpack.c.h.b16 %v91
    %v779 = vunpack.c.l.b16 %v92
    %v780 = vunpack.c.h.b16 %v92
    %v781 = vunpack.c.l.b16 %v93
    %v782 = vunpack.c.h.b16 %v93
    %v783 = vunpack.c.l.b16 %v94
    %v784 = vunpack.c.h.b16 %v94
    %v785 = vunpack.c.l.b16 %v95
    %v786 = vunpack.c.h.b16 %v95
    %v787 = vunpack.c.l.b16 %v96
    %v788 = vunpack.c.h.b16 %v96
    %v789 = vunpack.c.l.b16 %v97
    %v790 = vunpack.c.h.b16 %v97
    %v791 = vunpack.c.l.b16 %v98
    %v792 = vunpack.c.h.b16 %v98
    %v793 = vunpack.c.l.b16 %v99
    %v794 = vunpack.c.h.b16 %v99
    %v795 = vunpack.c.l.b16 %v100
    %v796 = vunpack.c.h.b16 %v100
    %v797 = vunpack.c.l.b16 %v101
    %v798 = vunpack.c.h.b16 %v101
    %v799 = vunpack.c.l.b16 %v102
    %v800 = vunpack.c.h.b16 %v102
    %v801 = vunpack.c.l.b16 %v103
    %v802 = vunpack.c.h.b16 %v103
    %v803 = vunpack.c.l.b16 %v104
    %v804 = vunpack.c.h.b16 %v104
    %v805 = vunpack.c.l.b16 %v105
    %v806 = vunpack.c.h.b16 %v105
    %v807 = vunpack.c.l.b16 %v106
    %v808 = vunpack.c.h.b16 %v106
    %v809 = vunpack.c.l.b16 %v107
    %v810 = vunpack.c.h.b16 %v107
    %v811 = vunpack.c.l.b16 %v108
    %v812 = vunpack.c.h.b16 %v108
    %v813 = vunpack.c.l.b16 %v109
    %v814 = vunpack.c.h.b16 %v109
    %v815 = vunpack.c.l.b16 %v110
    %v816 = vunpack.c.h.b16 %v110
    %v817 = vunpack.c.l.b16 %v111
    %v818 = vunpack.c.h.b16 %v111
    %v819 = vunpack.c.l.b16 %v112
    %v820 = vunpack.c.h.b16 %v112
    %v821 = vunpack.c.l.b16 %v113
    %v822 = vunpack.c.h.b16 %v113
    %v823 = vunpack.c.l.b16 %v114
    %v824 = vunpack.c.h.b16 %v114
    %v825 = vunpack.c.l.b16 %v115
    %v826 = vunpack.c.h.b16 %v115
    %v827 = vunpack.c.l.b16 %v116
    %v828 = vunpack.c.h.b16 %v116
    %v829 = vunpack.c.l.b16 %v117
    %v830 = vunpack.c.h.b16 %v117
    %v831 = vunpack.c.l.b16 %v118
    %v832 = vunpack.c.h.b16 %v118
    %v833 = vunpack.c.l.b16 %v119
    %v834 = vunpack.c.h.b16 %v119
    %v835 = vunpack.c.l.b16 %v120
    %v836 = vunpack.c.h.b16 %v120
    %v837 = vunpack.c.l.b16 %v121
    %v838 = vunpack.c.h.b16 %v121
    %v839 = vunpack.c.l.b16 %v122
    %v840 = vunpack.c.h.b16 %v122
    %v841 = vunpack.c.l.b16 %v123
    %v842 = vunpack.c.h.b16 %v123
    %v843 = vunpack.c.l.b16 %v124
    %v844 = vunpack.c.h.b16 %v124
    %v845 = vunpack.c.l.b16 %v125
    %v846 = vunpack.c.h.b16 %v125
    %v847 = vunpack.c.l.b16 %v126
    %v848 = vunpack.c.h.b16 %v126
    %v849 = vunpack.c.l.b16 %v127
    %v850 = vunpack.c.h.b16 %v127
    %v851 = vunpack.c.l.b16 %v128
    %v852 = vunpack.c.h.b16 %v128
    %v853 = vunpack.c.l.b16 %v129
    %v854 = vunpack.c.h.b16 %v129
    %v855 = vunpack.c.l.b16 %v130
    %v856 = vunpack.c.h.b16 %v130
    %v857 = vunpack.c.l.b16 %v131
    %v858 = vunpack.c.h.b16 %v131
    %v859 = vunpack.c.l.b16 %v132
    %v860 = vunpack.c.h.b16 %v132
    %v861 = vunpack.c.l.b16 %v133
    %v862 = vunpack.c.h.b16 %v133
    %v863 = vunpack.c.l.b16 %v134
    %v864 = vunpack.c.h.b16 %v134
    %v865 = vunpack.c.l.b16 %v135
    %v866 = vunpack.c.h.b16 %v135
    %v867 = vunpack.c.l.b16 %v136
    %v868 = vunpack.c.h.b16 %v136
    %v869 = vunpack.c.l.b16 %v137
    %v870 = vunpack.c.h.b16 %v137
    %v871 = vunpack.c.l.b16 %v138
    %v872 = vunpack.c.h.b16 %v138
    %v873 = vunpack.c.l.b16 %v139
    %v874 = vunpack.c.h.b16 %v139
    %v875 = vunpack.c.l.b16 %v140
    %v876 = vunpack.c.h.b16 %v140
    %v877 = vunpack.c.l.b16 %v141
    %v878 = vunpack.c.h.b16 %v141
    %v879 = vunpack.c.l.b16 %v142
    %v880 = vunpack.c.h.b16 %v142
    %v881 = vunpack.c.l.b16 %v143
    %v882 = vunpack.c.h.b16 %v143
    %v883 = vunpack.c.l.b16 %v144
    %v884 = vunpack.c.h.b16 %v144
    %v885 = vunpack.c.l.b16 %v145
    %v886 = vunpack.c.h.b16 %v145
    %v887 = vunpack.c.l.b16 %v146
    %v888 = vunpack.c.h.b16 %v146
    %v889 = vunpack.c.l.b16 %v147
    %v890 = vunpack.c.h.b16 %v147
    %v891 = vunpack.c.l.b16 %v148
    %v892 = vunpack.c.h.b16 %v148
    %v893 = vunpack.c.l.b16 %v149
    %v894 = vunpack.c.h.b16 %v149
    %v895 = vunpack.c.l.b16 %v150
    %v896 = vunpack.c.h.b16 %v150
    %v897 = vunpack.c.l.b16 %v151
    %v898 = vunpack.c.h.b16 %v151
    %v899 = vunpack.c.l.b16 %v152
    %v900 = vunpack.c.h.b16 %v152
    %v901 = vunpack.c.l.b16 %v153
    %v902 = vunpack.c.h.b16 %v153
    %v903 = vunpack.c.l.b16 %v154
    %v904 = vunpack.c.h.b16 %v154
    %v905 = vunpack.c.l.b16 %v155
    %v906 = vunpack.c.h.b16 %v155
    %v907 = vunpack.c.l.b16 %v156
    %v908 = vunpack.c.h.b16 %v156
    %v909 = vunpack.c.l.b16 %v157
    %v910 = vunpack.c.h.b16 %v157
    %v911 = vunpack.c.l.b16 %v158
    %v912 = vunpack.c.h.b16 %v158
    %v913 = vunpack.c.l.b16 %v159
    %v914 = vunpack.c.h.b16 %v159
    %v915 = vunpack.c.l.b16 %v160
    %v916 = vunpack.c.h.b16 %v160
    %v917 = vunpack.c.l.b16 %v161
    %v918 = vunpack.c.h.b16 %v161
    %v919 = vunpack.c.l.b16 %v162
    %v920 = vunpack.c.h.b16 %v162
    %v921 = vunpack.c.l.b16 %v163
    %v922 = vunpack.c.h.b16 %v163
    %v923 = vunpack.c.l.b16 %v164
    %v924 = vunpack.c.h.b16 %v164
    %v925 = vunpack.c.l.b16 %v165
    %v926 = vunpack.c.h.b16 %v165
    %v927 = vunpack.c.l.b16 %v166
    %v928 = vunpack.c.h.b16 %v166
    %v929 = vunpack.c.l.b16 %v167
    %v930 = vunpack.c.h.b16 %v167
    %v931 = vunpack.c.l.b16 %v168
    %v932 = vunpack.c.h.b16 %v168
    %v933 = vunpack.c.l.b16 %v169
    %v934 = vunpack.c.h.b16 %v169
    %v935 = vunpack.c.l.b16 %v170
    %v936 = vunpack.c.h.b16 %v170
    %v937 = vunpack.c.l.b16 %v171
    %v938 = vunpack.c.h.b16 %v171
    %v939 = vunpack.c.l.b16 %v172
    %v940 = vunpack.c.h.b16 %v172
    %v941 = vunpack.c.l.b16 %v173
    %v942 = vunpack.c.h.b16 %v173
    %v943 = vunpack.c.l.b16 %v174
    %v944 = vunpack.c.h.b16 %v174
    %v945 = vunpack.c.l.b16 %v175
    %v946 = vunpack.c.h.b16 %v175
    %v947 = vunpack.c.l.b16 %v176
    %v948 = vunpack.c.h.b16 %v176
    %v949 = vunpack.c.l.b16 %v177
    %v950 = vunpack.c.h.b16 %v177
    %v951 = vunpack.c.l.b16 %v178
    %v952 = vunpack.c.h.b16 %v178
    %v953 = vunpack.c.l.b16 %v179
    %v954 = vunpack.c.h.b16 %v179
    %v955 = vunpack.c.l.b16 %v180
    %v956 = vunpack.c.h.b16 %v180
    %v957 = vunpack.c.l.b16 %v181
    %v958 = vunpack.c.h.b16 %v181
    %v959 = vunpack.c.l.b16 %v182
    %v960 = vunpack.c.h.b16 %v182
    %v961 = vunpack.c.l.b16 %v183
    %v962 = vunpack.c.h.b16 %v183
    %v963 = vunpack.c.l.b16 %v184
    %v964 = vunpack.c.h.b16 %v184
    %v965 = vunpack.c.l.b16 %v185
    %v966 = vunpack.c.h.b16 %v185
    %v967 = vunpack.c.l.b16 %v186
    %v968 = vunpack.c.h.b16 %v186
    %v969 = vunpack.c.l.b16 %v187
    %v970 = vunpack.c.h.b16 %v187
    %v971 = vunpack.c.l.b16 %v188
    %v972 = vunpack.c.h.b16 %v188
    %v973 = vunpack.c.l.b16 %v189
    %v974 = vunpack.c.h.b16 %v189
    %v975 = vunpack.c.l.b16 %v190
    %v976 = vunpack.c.h.b16 %v190
    %v977 = vunpack.c.l.b16 %v191
    %v978 = vunpack.c.h.b16 %v191
    %v979 = vunpack.c.l.b16 %v192
    %v980 = vunpack.c.h.b16 %v192
    %v981 = vunpack.c.l.b16 %v193
    %v982 = vunpack.c.h.b16 %v193
    %v983 = vunpack.c.l.b16 %v194
    %v984 = vunpack.c.h.b16 %v194
    %v985 = vunpack.c.l.b16 %v195
    %v986 = vunpack.c.h.b16 %v195
    %v987 = vunpack.c.l.b16 %v196
    %v988 = vunpack.c.h.b16 %v196
    %v989 = vunpack.c.l.b16 %v197
    %v990 = vunpack.c.h.b16 %v197
    %v991 = vunpack.c.l.b16 %v198
    %v992 = vunpack.c.h.b16 %v198
    %v993 = vunpack.c.l.b16 %v199
    %v994 = vunpack.c.h.b16 %v199
    %v995 = vunpack.c.l.b16 %v200
    %v996 = vunpack.c.h.b16 %v200
    %v997 = vunpack.c.l.b16 %v201
    %v998 = vunpack.c.h.b16 %v201
    %v999 = vunpack.c.l.b16 %v202
    %v1000 = vunpack.c.h.b16 %v202
    %v1001 = vunpack.c.l.b16 %v203
    %v1002 = vunpack.c.h.b16 %v203
    %v1003 = vunpack.c.l.b16 %v204
    %v1004 = vunpack.c.h.b16 %v204
    %v1005 = vunpack.c.l.b16 %v205
    %v1006 = vunpack.c.h.b16 %v205
    %v1007 = vunpack.c.l.b16 %v206
    %v1008 = vunpack.c.h.b16 %v206
    %v1009 = vunpack.c.l.b16 %v207
    %v1010 = vunpack.c.h.b16 %v207
    %v1011 = vunpack.c.l.b16 %v208
    %v1012 = vunpack.c.h.b16 %v208
    %v1013 = vunpack.c.l.b16 %v209
    %v1014 = vunpack.c.h.b16 %v209
    %v1015 = vunpack.c.l.b16 %v210
    %v1016 = vunpack.c.h.b16 %v210
    %v1017 = vunpack.c.l.b16 %v211
    %v1018 = vunpack.c.h.b16 %v211
    %v1019 = vunpack.c.l.b16 %v212
    %v1020 = vunpack.c.h.b16 %v212
    %v1021 = vunpack.c.l.b16 %v213
    %v1022 = vunpack.c.h.b16 %v213
    %v1023 = vunpack.c.l.b16 %v214
    %v1024 = vunpack.c.h.b16 %v214
    %v1025 = vunpack.c.l.b16 %v215
    %v1026 = vunpack.c.h.b16 %v215
    %v1027 = vunpack.c.l.b16 %v216
    %v1028 = vunpack.c.h.b16 %v216
    %v1029 = vunpack.c.l.b16 %v217
    %v1030 = vunpack.c.h.b16 %v217
    %v1031 = vunpack.c.l.b16 %v218
    %v1032 = vunpack.c.h.b16 %v218
    %v1033 = vunpack.c.l.b16 %v219
    %v1034 = vunpack.c.h.b16 %v219
    %v1035 = vunpack.c.l.b16 %v220
    %v1036 = vunpack.c.h.b16 %v220
    %v1037 = vunpack.c.l.b16 %v221
    %v1038 = vunpack.c.h.b16 %v221
    %v1039 = vunpack.c.l.b16 %v222
    %v1040 = vunpack.c.h.b16 %v222
    %v1041 = vunpack.c.l.b16 %v223
    %v1042 = vunpack.c.h.b16 %v223
    %v1043 = vunpack.c.l.b16 %v224
    %v1044 = vunpack.c.h.b16 %v224
    %v1045 = vunpack.c.l.b16 %v225
    %v1046 = vunpack.c.h.b16 %v225
    %v1047 = vunpack.c.l.b16 %v226
    %v1048 = vunpack.c.h.b16 %v226
    %v1049 = vunpack.c.l.b16 %v227
    %v1050 = vunpack.c.h.b16 %v227
    %v1051 = vunpack.c.l.b16 %v228
    %v1052 = vunpack.c.h.b16 %v228
    %v1053 = vunpack.c.l.b16 %v229
    %v1054 = vunpack.c.h.b16 %v229
    %v1055 = vunpack.c.l.b16 %v230
    %v1056 = vunpack.c.h.b16 %v230
    %v1057 = vunpack.c.l.b16 %v231
    %v1058 = vunpack.c.h.b16 %v231
    %v1059 = vunpack.c.l.b16 %v232
    %v1060 = vunpack.c.h.b16 %v232
    %v1061 = vunpack.c.l.b16 %v233
    %v1062 = vunpack.c.h.b16 %v233
    %v1063 = vunpack.c.l.b16 %v234
    %v1064 = vunpack.c.h.b16 %v234
    %v1065 = vunpack.c.l.b16 %v235
    %v1066 = vunpack.c.h.b16 %v235
    %v1067 = vunpack.c.l.b16 %v236
    %v1068 = vunpack.c.h.b16 %v236
    %v1069 = vunpack.c.l.b16 %v237
    %v1070 = vunpack.c.h.b16 %v237
    %v1071 = vunpack.c.l.b16 %v238
    %v1072 = vunpack.c.h.b16 %v238
    %v1073 = vunpack.c.l.b16 %v239
    %v1074 = vunpack.c.h.b16 %v239
    %v1075 = vunpack.c.l.b16 %v240
    %v1076 = vunpack.c.h.b16 %v240
    %v1077 = vunpack.c.l.b16 %v241
    %v1078 = vunpack.c.h.b16 %v241
    %v1079 = vunpack.c.l.b16 %v242
    %v1080 = vunpack.c.h.b16 %v242
    %v1081 = vunpack.c.l.b16 %v243
    %v1082 = vunpack.c.h.b16 %v243
    %v1083 = vunpack.c.l.b16 %v244
    %v1084 = vunpack.c.h.b16 %v244
    %v1085 = vunpack.c.l.b16 %v245
    %v1086 = vunpack.c.h.b16 %v245
    %v1087 = vunpack.c.l.b16 %v246
    %v1088 = vunpack.c.h.b16 %v246
    %v1089 = vunpack.c.l.b16 %v247
    %v1090 = vunpack.c.h.b16 %v247
    %v1091 = vunpack.c.l.b16 %v248
    %v1092 = vunpack.c.h.b16 %v248
    %v1093 = vunpack.c.l.b16 %v249
    %v1094 = vunpack.c.h.b16 %v249
    %v1095 = vunpack.c.l.b16 %v250
    %v1096 = vunpack.c.h.b16 %v250
    %v1097 = vunpack.c.l.b16 %v251
    %v1098 = vunpack.c.h.b16 %v251
    %v1099 = vunpack.c.l.b16 %v252
    %v1100 = vunpack.c.h.b16 %v252
    %v1101 = vunpack.c.l.b16 %v253
    %v1102 = vunpack.c.h.b16 %v253
    %v1103 = vunpack.c.l.b16 %v254
    %v1104 = vunpack.c.h.b16 %v254
    %v1105 = vunpack.c.l.b16 %v255
    %v1106 = vunpack.c.h.b16 %v255
    %v1107 = vunpack.c.l.b16 %v256
    %v1108 = vunpack.c.h.b16 %v256
    %v1109 = vunpack.c.l.b16 %v257
    %v1110 = vunpack.c.h.b16 %v257
    %v1111 = vunpack.c.l.b16 %v258
    %v1112 = vunpack.c.h.b16 %v258
    %v1113 = vunpack.c.l.b16 %v259
    %v1114 = vunpack.c.h.b16 %v259
    %v1115 = vunpack.c.l.b16 %v260
    %v1116 = vunpack.c.h.b16 %v260
    %v1117 = vunpack.c.l.b16 %v261
    %v1118 = vunpack.c.h.b16 %v261
    %v1119 = vunpack.c.l.b16 %v262
    %v1120 = vunpack.c.h.b16 %v262
    %v1121 = vunpack.c.l.b16 %v263
    %v1122 = vunpack.c.h.b16 %v263
    %v1123 = vunpack.c.l.b16 %v264
    %v1124 = vunpack.c.h.b16 %v264
    %v1125 = vunpack.c.l.b16 %v265
    %v1126 = vunpack.c.h.b16 %v265
    %v1127 = vunpack.c.l.b16 %v266
    %v1128 = vunpack.c.h.b16 %v266
    %v1129 = vunpack.c.l.b16 %v267
    %v1130 = vunpack.c.h.b16 %v267
    %v1131 = vunpack.c.l.b16 %v268
    %v1132 = vunpack.c.h.b16 %v268
    %v1133 = vunpack.c.l.b16 %v269
    %v1134 = vunpack.c.h.b16 %v269
    %v1135 = vunpack.c.l.b16 %v270
    %v1136 = vunpack.c.h.b16 %v270
    %v1137 = vunpack.c.l.b16 %v271
    %v1138 = vunpack.c.h.b16 %v271
    %v1139 = vunpack.c.l.b16 %v272
    %v1140 = vunpack.c.h.b16 %v272
    %v1141 = vunpack.c.l.b16 %v273
    %v1142 = vunpack.c.h.b16 %v273
    %v1143 = vunpack.c.l.b16 %v274
    %v1144 = vunpack.c.h.b16 %v274
    %v1145 = vunpack.c.l.b16 %v275
    %v1146 = vunpack.c.h.b16 %v275
    %v1147 = vunpack.c.l.b16 %v276
    %v1148 = vunpack.c.h.b16 %v276
    %v1149 = vunpack.c.l.b16 %v277
    %v1150 = vunpack.c.h.b16 %v277
    %v1151 = vunpack.c.l.b16 %v278
    %v1152 = vunpack.c.h.b16 %v278
    %v1153 = vunpack.c.l.b16 %v279
    %v1154 = vunpack.c.h.b16 %v279
    %v1155 = vunpack.c.l.b16 %v280
    %v1156 = vunpack.c.h.b16 %v280
    %v1157 = vunpack.c.l.b16 %v281
    %v1158 = vunpack.c.h.b16 %v281
    %v1159 = vunpack.c.l.b16 %v282
    %v1160 = vunpack.c.h.b16 %v282
    %v1161 = vunpack.c.l.b16 %v283
    %v1162 = vunpack.c.h.b16 %v283
    %v1163 = vunpack.c.l.b16 %v284
    %v1164 = vunpack.c.h.b16 %v284
    %v1165 = vunpack.c.l.b16 %v285
    %v1166 = vunpack.c.h.b16 %v285
    %v1167 = vunpack.c.l.b16 %v286
    %v1168 = vunpack.c.h.b16 %v286
    %v1169 = vunpack.c.l.b16 %v287
    %v1170 = vunpack.c.h.b16 %v287
    %v1171 = vunpack.c.l.b16 %v288
    %v1172 = vunpack.c.h.b16 %v288
    %v1173 = vunpack.c.l.b16 %v289
    %v1174 = vunpack.c.h.b16 %v289
    %v1175 = vunpack.c.l.b16 %v290
    %v1176 = vunpack.c.h.b16 %v290
    %v1177 = vunpack.c.l.b16 %v291
    %v1178 = vunpack.c.h.b16 %v291
    %v1179 = vunpack.c.l.b16 %v292
    %v1180 = vunpack.c.h.b16 %v292
    %v1181 = vunpack.c.l.b16 %v293
    %v1182 = vunpack.c.h.b16 %v293
    %v1183 = vunpack.c.l.b16 %v294
    %v1184 = vunpack.c.h.b16 %v294
    %v1185 = vunpack.c.l.b16 %v295
    %v1186 = vunpack.c.h.b16 %v295
    %v1187 = vunpack.c.l.b16 %v296
    %v1188 = vunpack.c.h.b16 %v296
    %v1189 = vunpack.c.l.b16 %v297
    %v1190 = vunpack.c.h.b16 %v297
    %v1191 = vunpack.c.l.b16 %v298
    %v1192 = vunpack.c.h.b16 %v298
    %v1193 = vunpack.c.l.b16 %v299
    %v1194 = vunpack.c.h.b16 %v299
    %v1195 = vunpack.c.l.b16 %v300
    %v1196 = vunpack.c.h.b16 %v300
    %v1197 = vunpack.c.l.b16 %v301
    %v1198 = vunpack.c.h.b16 %v301
    %v1199 = vunpack.c.l.b16 %v302
    %v1200 = vunpack.c.h.b16 %v302
    %v1201 = vunpack.c.l.b16 %v303
    %v1202 = vunpack.c.h.b16 %v303
    %v1203 = vunpack.c.l.b16 %v304
    %v1204 = vunpack.c.h.b16 %v304
    %v1205 = vunpack.c.l.b16 %v305
    %v1206 = vunpack.c.h.b16 %v305
    %v1207 = vunpack.c.l.b16 %v306
    %v1208 = vunpack.c.h.b16 %v306
    %v1209 = vunpack.c.l.b16 %v307
    %v1210 = vunpack.c.h.b16 %v307
    %v1211 = vunpack.c.l.b16 %v308
    %v1212 = vunpack.c.h.b16 %v308
    %v1213 = vunpack.c.l.b16 %v309
    %v1214 = vunpack.c.h.b16 %v309
    %v1215 = vunpack.c.l.b16 %v310
    %v1216 = vunpack.c.h.b16 %v310
    %v1217 = vunpack.c.l.b16 %v311
    %v1218 = vunpack.c.h.b16 %v311
    %v1219 = vunpack.c.l.b16 %v312
    %v1220 = vunpack.c.h.b16 %v312
    %v1221 = vunpack.c.l.b16 %v313
    %v1222 = vunpack.c.h.b16 %v313
    %v1223 = vunpack.c.l.b16 %v314
    %v1224 = vunpack.c.h.b16 %v314
    %v1225 = vunpack.c.l.b16 %v315
    %v1226 = vunpack.c.h.b16 %v315
    %v1227 = vunpack.c.l.b16 %v316
    %v1228 = vunpack.c.h.b16 %v316
    %v1229 = vunpack.c.l.b16 %v317
    %v1230 = vunpack.c.h.b16 %v317
    %v1231 = vunpack.c.l.b16 %v318
    %v1232 = vunpack.c.h.b16 %v318
    %v1233 = vunpack.c.l.b16 %v319
    %v1234 = vunpack.c.h.b16 %v319
    %v1235 = vunpack.c.l.b16 %v320
    %v1236 = vunpack.c.h.b16 %v320
    %v1237 = vunpack.c.l.b16 %v321
    %v1238 = vunpack.c.h.b16 %v321
    %v1239 = vunpack.c.l.b16 %v322
    %v1240 = vunpack.c.h.b16 %v322
    %v1241 = vunpack.c.l.b16 %v323
    %v1242 = vunpack.c.h.b16 %v323
    %v1243 = vunpack.c.l.b16 %v324
    %v1244 = vunpack.c.h.b16 %v324
    %v1245 = vunpack.c.l.b16 %v325
    %v1246 = vunpack.c.h.b16 %v325
    %v1247 = vunpack.c.l.b16 %v326
    %v1248 = vunpack.c.h.b16 %v326
    %v1249 = vunpack.c.l.b16 %v327
    %v1250 = vunpack.c.h.b16 %v327
    %v1251 = vunpack.c.l.b16 %v328
    %v1252 = vunpack.c.h.b16 %v328
    %v1253 = vunpack.c.l.b16 %v329
    %v1254 = vunpack.c.h.b16 %v329
    %v1255 = vunpack.c.l.b16 %v330
    %v1256 = vunpack.c.h.b16 %v330
    %v1257 = vunpack.c.l.b16 %v331
    %v1258 = vunpack.c.h.b16 %v331
    %v1259 = vunpack.c.l.b16 %v332
    %v1260 = vunpack.c.h.b16 %v332
    %v1261 = vunpack.c.l.b16 %v333
    %v1262 = vunpack.c.h.b16 %v333
    %v1263 = vunpack.c.l.b16 %v334
    %v1264 = vunpack.c.h.b16 %v334
    %v1265 = vunpack.c.l.b16 %v335
    %v1266 = vunpack.c.h.b16 %v335
    %v1267 = vunpack.c.l.b16 %v336
    %v1268 = vunpack.c.h.b16 %v336
    %v1269 = vunpack.c.l.b16 %v337
    %v1270 = vunpack.c.h.b16 %v337
    %v1271 = vunpack.c.l.b16 %v338
    %v1272 = vunpack.c.h.b16 %v338
    %v1273 = vunpack.c.l.b16 %v339
    %v1274 = vunpack.c.h.b16 %v339
    %v1275 = vunpack.c.l.b16 %v340
    %v1276 = vunpack.c.h.b16 %v340
    %v1277 = vunpack.c.l.b16 %v341
    %v1278 = vunpack.c.h.b16 %v341
    %v1279 = vunpack.c.l.b16 %v342
    %v1280 = vunpack.c.h.b16 %v342
    %v1281 = vunpack.c.l.b16 %v343
    %v1282 = vunpack.c.h.b16 %v343
    %v1283 = vunpack.c.l.b16 %v344
    %v1284 = vunpack.c.h.b16 %v344
    %v1285 = vunpack.c.l.b16 %v345
    %v1286 = vunpack.c.h.b16 %v345
    %v1287 = vunpack.c.l.b16 %v346
    %v1288 = vunpack.c.h.b16 %v346
    %v1289 = vpack.c.b16 %v781, %v777
    %v1290 = vpack.c.b16 %v782, %v778
    %v1291 = vpack.c.b16 %v783, %v779
    %v1292 = vpack.c.b16 %v784, %v780
    %v1293 = vpack.c.b16 %v789, %v785
    %v1294 = vpack.c.b16 %v790, %v786
    %v1295 = vpack.c.b16 %v791, %v787
    %v1296 = vpack.c.b16 %v792, %v788
    %v1297 = vpack.c.b16 %v797, %v793
    %v1298 = vpack.c.b16 %v798, %v794
    %v1299 = vpack.c.b16 %v799, %v795
    %v1300 = vpack.c.b16 %v800, %v796
    %v1301 = vpack.c.b16 %v805, %v801
    %v1302 = vpack.c.b16 %v806, %v802
    %v1303 = vpack.c.b16 %v807, %v803
    %v1304 = vpack.c.b16 %v808, %v804
    %v1305 = vpack.c.b16 %v813, %v809
    %v1306 = vpack.c.b16 %v814, %v810
    %v1307 = vpack.c.b16 %v815, %v811
    %v1308 = vpack.c.b16 %v816, %v812
    %v1309 = vpack.c.b16 %v821, %v817
    %v1310 = vpack.c.b16 %v822, %v818
    %v1311 = vpack.c.b16 %v823, %v819
    %v1312 = vpack.c.b16 %v824, %v820
    %v1313 = vpack.c.b16 %v829, %v825
    %v1314 = vpack.c.b16 %v830, %v826
    %v1315 = vpack.c.b16 %v831, %v827
    %v1316 = vpack.c.b16 %v832, %v828
    %v1317 = vpack.c.b16 %v837, %v833
    %v1318 = vpack.c.b16 %v838, %v834
    %v1319 = vpack.c.b16 %v839, %v835
    %v1320 = vpack.c.b16 %v840, %v836
    %v1321 = vpack.c.b16 %v845, %v841
    %v1322 = vpack.c.b16 %v846, %v842
    %v1323 = vpack.c.b16 %v847, %v843
    %v1324 = vpack.c.b16 %v848, %v844
    %v1325 = vpack.c.b16 %v853, %v849
    %v1326 = vpack.c.b16 %v854, %v850
    %v1327 = vpack.c.b16 %v855, %v851
    %v1328 = vpack.c.b16 %v856, %v852
    %v1329 = vpack.c.b16 %v861, %v857
    %v1330 = vpack.c.b16 %v862, %v858
    %v1331 = vpack.c.b16 %v863, %v859
    %v1332 = vpack.c.b16 %v864, %v860
    %v1333 = vpack.c.b16 %v869, %v865
    %v1334 = vpack.c.b16 %v870, %v866
    %v1335 = vpack.c.b16 %v871, %v867
    %v1336 = vpack.c.b16 %v872, %v868
    %v1337 = vpack.c.b16 %v877, %v873
    %v1338 = vpack.c.b16 %v878, %v874
    %v1339 = vpack.c.b16 %v879, %v875
    %v1340 = vpack.c.b16 %v880, %v876
    %v1341 = vpack.c.b16 %v885, %v881
    %v1342 = vpack.c.b16 %v886, %v882
    %v1343 = vpack.c.b16 %v887, %v883
    %v1344 = vpack.c.b16 %v888, %v884
    %v1345 = vpack.c.b16 %v893, %v889
    %v1346 = vpack.c.b16 %v894, %v890
    %v1347 = vpack.c.b16 %v895, %v891
    %v1348 = vpack.c.b16 %v896, %v892
    %v1349 = vpack.c.b16 %v901, %v897
    %v1350 = vpack.c.b16 %v902, %v898
    %v1351 = vpack.c.b16 %v903, %v899
    %v1352 = vpack.c.b16 %v904, %v900
    %v1353 = vpack.c.b16 %v909, %v905
    %v1354 = vpack.c.b16 %v910, %v906
    %v1355 = vpack.c.b16 %v911, %v907
    %v1356 = vpack.c.b16 %v912, %v908
    %v1357 = vpack.c.b16 %v917, %v913
    %v1358 = vpack.c.b16 %v918, %v914
    %v1359 = vpack.c.b16 %v919, %v915
    %v1360 = vpack.c.b16 %v920, %v916
    %v1361 = vpack.c.b16 %v925, %v921
    %v1362 = vpack.c.b16 %v926, %v922
    %v1363 = vpack.c.b16 %v927, %v923
    %v1364 = vpack.c.b16 %v928, %v924
    %v1365 = vpack.c.b16 %v933, %v929
    %v1366 = vpack.c.b16 %v934, %v930
    %v1367 = vpack.c.b16 %v935, %v931
    %v1368 = vpack.c.b16 %v936, %v932
    %v1369 = vpack.c.b16 %v941, %v937
    %v1370 = vpack.c.b16 %v942, %v938
    %v1371 = vpack.c.b16 %v943, %v939
    %v1372 = vpack.c.b16 %v944, %v940
    %v1373 = vpack.c.b16 %v949, %v945
    %v1374 = vpack.c.b16 %v950, %v946
    %v1375 = vpack.c.b16 %v951, %v947
    %v1376 = vpack.c.b16 %v952, %v948
    %v1377 = vpack.c.b16 %v957, %v953
    %v1378 = vpack.c.b16 %v958, %v954
    %v1379 = vpack.c.b16 %v959, %v955
    %v1380 = vpack.c.b16 %v960, %v956
    %v1381 = vpack.c.b16 %v965, %v961
    %v1382 = vpack.c.b16 %v966, %v962
    %v1383 = vpack.c.b16 %v967, %v963
    %v1384 = vpack.c.b16 %v968, %v964
    %v1385 = vpack.c.b16 %v973, %v969
    %v1386 = vpack.c.b16 %v974, %v970
    %v1387 = vpack.c.b16 %v975, %v971
    %v1388 = vpack.c.b16 %v976, %v972
    %v1389 = vpack.c.b16 %v981, %v977
    %v1390 = vpack.c.b16 %v982, %v978
    %v1391 = vpack.c.b16 %v983, %v979
    %v1392 = vpack.c.b16 %v984, %v980
    %v1393 = vpack.c.b16 %v989, %v985
    %v1394 = vpack.c.b16 %v990, %v986
    %v1395 = vpack.c.b16 %v991, %v987
    %v1396 = vpack.c.b16 %v992, %v988
    %v1397 = vpack.c.b16 %v997, %v993
    %v1398 = vpack.c.b16 %v998, %v994
    %v1399 = vpack.c.b16 %v999, %v995
    %v1400 = vpack.c.b16 %v1000, %v996
    %v1401 = vpack.c.b16 %v1005, %v1001
    %v1402 = vpack.c.b16 %v1006, %v1002
    %v1403 = vpack.c.b16 %v1007, %v1003
    %v1404 = vpack.c.b16 %v1008, %v1004
    %v1405 = vpack.c.b16 %v1013, %v1009
    %v1406 = vpack.c.b16 %v1014, %v1010
    %v1407 = vpack.c.b16 %v1015, %v1011
    %v1408 = vpack.c.b16 %v1016, %v1012
    %v1409 = vpack.c.b16 %v1021, %v1017
    %v1410 = vpack.c.b16 %v1022, %v1018
    %v1411 = vpack.c.b16 %v1023, %v1019
    %v1412 = vpack.c.b16 %v1024, %v1020
    %v1413 = vpack.c.b16 %v1029, %v1025
    %v1414 = vpack.c.b16 %v1030, %v1026
    %v1415 = vpack.c.b16 %v1031, %v1027
    %v1416 = vpack.c.b16 %v1032, %v1028
    %v1417 = vpack.c.b16 %v1037, %v1033
    %v1418 = vpack.c.b16 %v1038, %v1034
    %v1419 = vpack.c.b16 %v1039, %v1035
    %v1420 = vpack.c.b16 %v1040, %v1036
    %v1421 = vpack.c.b16 %v1045, %v1041
    %v1422 = vpack.c.b16 %v1046, %v1042
    %v1423 = vpack.c.b16 %v1047, %v1043
    %v1424 = vpack.c.b16 %v1048, %v1044
    %v1425 = vpack.c.b16 %v1053, %v1049
    %v1426 = vpack.c.b16 %v1054, %v1050
    %v1427 = vpack.c.b16 %v1055, %v1051
    %v1428 = vpack.c.b16 %v1056, %v1052
    %v1429 = vpack.c.b16 %v1061, %v1057
    %v1430 = vpack.c.b16 %v1062, %v1058
    %v1431 = vpack.c.b16 %v1063, %v1059
    %v1432 = vpack.c.b16 %v1064, %v1060
    %v1433 = vpack.c.b16 %v1069, %v1065
    %v1434 = vpack.c.b16 %v1070, %v1066
    %v1435 = vpack.c.b16 %v1071, %v1067
    %v1436 = vpack.c.b16 %v1072, %v1068
    %v1437 = vpack.c.b16 %v1077, %v1073
    %v1438 = vpack.c.b16 %v1078, %v1074
    %v1439 = vpack.c.b16 %v1079, %v1075
    %v1440 = vpack.c.b16 %v1080, %v1076
    %v1441 = vpack.c.b16 %v1085, %v1081
    %v1442 = vpack.c.b16 %v1086, %v1082
    %v1443 = vpack.c.b16 %v1087, %v1083
    %v1444 = vpack.c.b16 %v1088, %v1084
    %v1445 = vpack.c.b16 %v1093, %v1089
    %v1446 = vpack.c.b16 %v1094, %v1090
    %v1447 = vpack.c.b16 %v1095, %v1091
    %v1448 = vpack.c.b16 %v1096, %v1092
    %v1449 = vpack.c.b16 %v1101, %v1097
    %v1450 = vpack.c.b16 %v1102, %v1098
    %v1451 = vpack.c.b16 %v1103, %v1099
    %v1452 = vpack.c.b16 %v1104, %v1100
    %v1453 = vpack.c.b16 %v1109, %v1105
    %v1454 = vpack.c.b16 %v1110, %v1106
    %v1455 = vpack.c.b16 %v1111, %v1107
    %v1456 = vpack.c.b16 %v1112, %v1108
    %v1457 = vpack.c.b16 %v1117, %v1113
    %v1458 = vpack.c.b16 %v1118, %v1114
    %v1459 = vpack.c.b16 %v1119, %v1115
    %v1460 = vpack.c.b16 %v1120, %v1116
    %v1461 = vpack.c.b16 %v1125, %v1121
    %v1462 = vpack.c.b16 %v1126, %v1122
    %v1463 = vpack.c.b16 %v1127, %v1123
    %v1464 = vpack.c.b16 %v1128, %v1124
    %v1465 = vpack.c.b16 %v1133, %v1129
    %v1466 = vpack.c.b16 %v1134, %v1130
    %v1467 = vpack.c.b16 %v1135, %v1131
    %v1468 = vpack.c.b16 %v1136, %v1132
    %v1469 = vpack.c.b16 %v1141, %v1137
    %v1470 = vpack.c.b16 %v1142, %v1138
    %v1471 = vpack.c.b16 %v1143, %v1139
    %v1472 = vpack.c.b16 %v1144, %v1140
    %v1473 = vpack.c.b16 %v1149, %v1145
    %v1474 = vpack.c.b16 %v1150, %v1146
    %v1475 = vpack.c.b16 %v1151, %v1147
    %v1476 = vpack.c.b16 %v1152, %v1148
    %v1477 = vpack.c.b16 %v1157, %v1153
    %v1478 = vpack.c.b16 %v1158, %v1154
    %v1479 = vpack.c.b16 %v1159, %v1155
    %v1480 = vpack.c.b16 %v1160, %v1156
    %v1481 = vpack.c.b16 %v1165, %v1161
    %v1482 = vpack.c.b16 %v1166, %v1162
    %v1483 = vpack.c.b16 %v1167, %v1163
    %v1484 = vpack.c.b16 %v1168, %v1164
    %v1485 = vpack.c.b16 %v1173, %v1169
    %v1486 = vpack.c.b16 %v1174, %v1170
    %v1487 = vpack.c.b16 %v1175, %v1171
    %v1488 = vpack.c.b16 %v1176, %v1172
    %v1489 = vpack.c.b16 %v1181, %v1177
    %v1490 = vpack.c.b16 %v1182, %v1178
    %v1491 = vpack.c.b16 %v1183, %v1179
    %v1492 = vpack.c.b16 %v1184, %v1180
    %v1493 = vpack.c.b16 %v1189, %v1185
    %v1494 = vpack.c.b16 %v1190, %v1186
    %v1495 = vpack.c.b16 %v1191, %v1187
    %v1496 = vpack.c.b16 %v1192, %v1188
    %v1497 = vpack.c.b16 %v1197, %v1193
    %v1498 = vpack.c.b16 %v1198, %v1194
    %v1499 = vpack.c.b16 %v1199, %v1195
    %v1500 = vpack.c.b16 %v1200, %v1196
    %v1501 = vpack.c.b16 %v1205, %v1201
    %v1502 = vpack.c.b16 %v1206, %v1202
    %v1503 = vpack.c.b16 %v1207, %v1203
    %v1504 = vpack.c.b16 %v1208, %v1204
    %v1505 = vpack.c.b16 %v1213, %v1209
    %v1506 = vpack.c.b16 %v1214, %v1210
    %v1507 = vpack.c.b16 %v1215, %v1211
    %v1508 = vpack.c.b16 %v1216, %v1212
    %v1509 = vpack.c.b16 %v1221, %v1217
    %v1510 = vpack.c.b16 %v1222, %v1218
    %v1511 = vpack.c.b16 %v1223, %v1219
    %v1512 = vpack.c.b16 %v1224, %v1220
    %v1513 = vpack.c.b16 %v1229, %v1225
    %v1514 = vpack.c.b16 %v1230, %v1226
    %v1515 = vpack.c.b16 %v1231, %v1227
    %v1516 = vpack.c.b16 %v1232, %v1228
    %v1517 = vpack.c.b16 %v1237, %v1233
    %v1518 = vpack.c.b16 %v1238, %v1234
    %v1519 = vpack.c.b16 %v1239, %v1235
    %v1520 = vpack.c.b16 %v1240, %v1236
    %v1521 = vpack.c.b16 %v1245, %v1241
    %v1522 = vpack.c.b16 %v1246, %v1242
    %v1523 = vpack.c.b16 %v1247, %v1243
    %v1524 = vpack.c.b16 %v1248, %v1244
    %v1525 = vpack.c.b16 %v1253, %v1249
    %v1526 = vpack.c.b16 %v1254, %v1250
    %v1527 = vpack.c.b16 %v1255, %v1251
    %v1528 = vpack.c.b16 %v1256, %v1252
    %v1529 = vpack.c.b16 %v1261, %v1257
    %v1530 = vpack.c.b16 %v1262, %v1258
    %v1531 = vpack.c.b16 %v1263, %v1259
    %v1532 = vpack.c.b16 %v1264, %v1260
    %v1533 = vpack.c.b16 %v1269, %v1265
    %v1534 = vpack.c.b16 %v1270, %v1266
    %v1535 = vpack.c.b16 %v1271, %v1267
    %v1536 = vpack.c.b16 %v1272, %v1268
    %v1537 = vpack.c.b16 %v1277, %v1273
    %v1538 = vpack.c.b16 %v1278, %v1274
    %v1539 = vpack.c.b16 %v1279, %v1275
    %v1540 = vpack.c.b16 %v1280, %v1276
    %v1541 = vpack.c.b16 %v1285, %v1281
    %v1542 = vpack.c.b16 %v1286, %v1282
    %v1543 = vpack.c.b16 %v1287, %v1283
    %v1544 = vpack.c.b16 %v1288, %v1284
    %1801 = vmatprep.subr.bf16.mxu0 %v1290
    %1802 = vmatpush1.bf16.msra.mxu0 %v1289
    %1803 = vmatprep.subr.bf16.mxu0 %v1294
    %1804 = vmatpush1.bf16.msra.mxu0 %v1293
    %1805 = vmatprep.subr.bf16.mxu0 %v1298
    %1806 = vmatpush1.bf16.msra.mxu0 %v1297
    %1807 = vmatprep.subr.bf16.mxu0 %v1302
    %1808 = vmatpush1.bf16.msra.mxu0 %v1301
    %1809 = vmatprep.subr.bf16.mxu0 %v1306
    %1810 = vmatpush1.bf16.msra.mxu0 %v1305
    %1811 = vmatprep.subr.bf16.mxu0 %v1310
    %1812 = vmatpush1.bf16.msra.mxu0 %v1309
    %1813 = vmatprep.subr.bf16.mxu0 %v1314
    %1814 = vmatpush1.bf16.msra.mxu0 %v1313
    %1815 = vmatprep.subr.bf16.mxu0 %v1318
    %1816 = vmatpush1.bf16.msra.mxu0 %v1317
    %1817 = vmatprep.subr.bf16.mxu0 %v1322
    %1818 = vmatpush1.bf16.msra.mxu0 %v1321
    %1819 = vmatprep.subr.bf16.mxu0 %v1326
    %1820 = vmatpush1.bf16.msra.mxu0 %v1325
    %1821 = vmatprep.subr.bf16.mxu0 %v1330
    %1822 = vmatpush1.bf16.msra.mxu0 %v1329
    %1823 = vmatprep.subr.bf16.mxu0 %v1334
    %1824 = vmatpush1.bf16.msra.mxu0 %v1333
    %1825 = vmatprep.subr.bf16.mxu0 %v1338
    %1826 = vmatpush1.bf16.msra.mxu0 %v1337
    %1827 = vmatprep.subr.bf16.mxu0 %v1342
    %1828 = vmatpush1.bf16.msra.mxu0 %v1341
    %1829 = vmatprep.subr.bf16.mxu0 %v1346
    %1830 = vmatpush1.bf16.msra.mxu0 %v1345
    %1831 = vmatprep.subr.bf16.mxu0 %v1350
    %1832 = vmatpush1.bf16.msra.mxu0 %v1349
    %1833 = vmatprep.mubr.bf16.mxu0 %v509
    %1834 = vmatmul.mubr.bf16.gmra.mrb[0].mxu0 %v505
    %v1835 = vpop.f32.mrb[0].mxu0
    %v1836 = vadd.f32 %v352, %v1835
    %v1837 = vpop.f32.mrb[0].mxu0
    %v1838 = vadd.f32 %v356, %v1837
    %v1839 = vpop.f32.mrb[0].mxu0
    %v1840 = vadd.f32 %v352, %v1839
    %v1841 = vpop.f32.mrb[0].mxu0
    %v1842 = vadd.f32 %v356, %v1841
    %1843 = vdwg.mxu0
    %1844 = vmatprep.subr.bf16.mxu0 %v1354
    %1845 = vmatpush1.bf16.msra.mxu0 %v1353
    %1846 = vmatprep.subr.bf16.mxu0 %v1358
    %1847 = vmatpush1.bf16.msra.mxu0 %v1357
    %1848 = vmatprep.subr.bf16.mxu0 %v1362
    %1849 = vmatpush1.bf16.msra.mxu0 %v1361
    %1850 = vmatprep.subr.bf16.mxu0 %v1366
    %1851 = vmatpush1.bf16.msra.mxu0 %v1365
    %1852 = vmatprep.subr.bf16.mxu0 %v1370
    %1853 = vmatpush1.bf16.msra.mxu0 %v1369
    %1854 = vmatprep.subr.bf16.mxu0 %v1374
    %1855 = vmatpush1.bf16.msra.mxu0 %v1373
    %1856 = vmatprep.subr.bf16.mxu0 %v1378
    %1857 = vmatpush1.bf16.msra.mxu0 %v1377
    %1858 = vmatprep.subr.bf16.mxu0 %v1382
    %1859 = vmatpush1.bf16.msra.mxu0 %v1381
    %1860 = vmatprep.subr.bf16.mxu0 %v1386
    %1861 = vmatpush1.bf16.msra.mxu0 %v1385
    %1862 = vmatprep.subr.bf16.mxu0 %v1390
    %1863 = vmatpush1.bf16.msra.mxu0 %v1389
    %1864 = vmatprep.subr.bf16.mxu0 %v1394
    %1865 = vmatpush1.bf16.msra.mxu0 %v1393
    %1866 = vmatprep.subr.bf16.mxu0 %v1398
    %1867 = vmatpush1.bf16.msra.mxu0 %v1397
    %1868 = vmatprep.subr.bf16.mxu0 %v1402
    %1869 = vmatpush1.bf16.msra.mxu0 %v1401
    %1870 = vmatprep.subr.bf16.mxu0 %v1406
    %1871 = vmatpush1.bf16.msra.mxu0 %v1405
    %1872 = vmatprep.subr.bf16.mxu0 %v1410
    %1873 = vmatpush1.bf16.msra.mxu0 %v1409
    %1874 = vmatprep.subr.bf16.mxu0 %v1414
    %1875 = vmatpush1.bf16.msra.mxu0 %v1413
    %1876 = vmatprep.mubr.bf16.mxu0 %v510
    %1877 = vmatmul.mubr.bf16.gmra.mrb[0].mxu0 %v506
    %v1878 = vpop.f32.mrb[0].mxu0
    %v1879 = vadd.f32 %v1836, %v1878
    %v1880 = vpop.f32.mrb[0].mxu0
    %v1881 = vadd.f32 %v1838, %v1880
    %v1882 = vpop.f32.mrb[0].mxu0
    %v1883 = vadd.f32 %v1840, %v1882
    %v1884 = vpop.f32.mrb[0].mxu0
    %v1885 = vadd.f32 %v1842, %v1884
    %1886 = vdwg.mxu0
    %1887 = vmatprep.subr.bf16.mxu0 %v1418
    %1888 = vmatpush1.bf16.msra.mxu0 %v1417
    %1889 = vmatprep.subr.bf16.mxu0 %v1422
    %1890 = vmatpush1.bf16.msra.mxu0 %v1421
    %1891 = vmatprep.subr.bf16.mxu0 %v1426
    %1892 = vmatpush1.bf16.msra.mxu0 %v1425
    %1893 = vmatprep.subr.bf16.mxu0 %v1430
    %1894 = vmatpush1.bf16.msra.mxu0 %v1429
    %1895 = vmatprep.subr.bf16.mxu0 %v1434
    %1896 = vmatpush1.bf16.msra.mxu0 %v1433
    %1897 = vmatprep.subr.bf16.mxu0 %v1438
    %1898 = vmatpush1.bf16.msra.mxu0 %v1437
    %1899 = vmatprep.subr.bf16.mxu0 %v1442
    %1900 = vmatpush1.bf16.msra.mxu0 %v1441
    %1901 = vmatprep.subr.bf16.mxu0 %v1446
    %1902 = vmatpush1.bf16.msra.mxu0 %v1445
    %1903 = vmatprep.subr.bf16.mxu0 %v1450
    %1904 = vmatpush1.bf16.msra.mxu0 %v1449
    %1905 = vmatprep.subr.bf16.mxu0 %v1454
    %1906 = vmatpush1.bf16.msra.mxu0 %v1453
    %1907 = vmatprep.subr.bf16.mxu0 %v1458
    %1908 = vmatpush1.bf16.msra.mxu0 %v1457
    %1909 = vmatprep.subr.bf16.mxu0 %v1462
    %1910 = vmatpush1.bf16.msra.mxu0 %v1461
    %1911 = vmatprep.subr.bf16.mxu0 %v1466
    %1912 = vmatpush1.bf16.msra.mxu0 %v1465
    %1913 = vmatprep.subr.bf16.mxu0 %v1470
    %1914 = vmatpush1.bf16.msra.mxu0 %v1469
    %1915 = vmatprep.subr.bf16.mxu0 %v1474
    %1916 = vmatpush1.bf16.msra.mxu0 %v1473
    %1917 = vmatprep.subr.bf16.mxu0 %v1478
    %1918 = vmatpush1.bf16.msra.mxu0 %v1477
    %1919 = vmatprep.mubr.bf16.mxu0 %v511
    %1920 = vmatmul.mubr.bf16.gmra.mrb[0].mxu0 %v507
    %v1921 = vpop.f32.mrb[0].mxu0
    %v1922 = vadd.f32 %v1879, %v1921
    %v1923 = vpop.f32.mrb[0].mxu0
    %v1924 = vadd.f32 %v1881, %v1923
    %v1925 = vpop.f32.mrb[0].mxu0
    %v1926 = vadd.f32 %v1883, %v1925
    %v1927 = vpop.f32.mrb[0].mxu0
    %v1928 = vadd.f32 %v1885, %v1927
    %1929 = vdwg.mxu0
    %1930 = vmatprep.subr.bf16.mxu0 %v1482
    %1931 = vmatpush1.bf16.msra.mxu0 %v1481
    %1932 = vmatprep.subr.bf16.mxu0 %v1486
    %1933 = vmatpush1.bf16.msra.mxu0 %v1485
    %1934 = vmatprep.subr.bf16.mxu0 %v1490
    %1935 = vmatpush1.bf16.msra.mxu0 %v1489
    %1936 = vmatprep.subr.bf16.mxu0 %v1494
    %1937 = vmatpush1.bf16.msra.mxu0 %v1493
    %1938 = vmatprep.subr.bf16.mxu0 %v1498
    %1939 = vmatpush1.bf16.msra.mxu0 %v1497
    %1940 = vmatprep.subr.bf16.mxu0 %v1502
    %1941 = vmatpush1.bf16.msra.mxu0 %v1501
    %1942 = vmatprep.subr.bf16.mxu0 %v1506
    %1943 = vmatpush1.bf16.msra.mxu0 %v1505
    %1944 = vmatprep.subr.bf16.mxu0 %v1510
    %1945 = vmatpush1.bf16.msra.mxu0 %v1509
    %1946 = vmatprep.subr.bf16.mxu0 %v1514
    %1947 = vmatpush1.bf16.msra.mxu0 %v1513
    %1948 = vmatprep.subr.bf16.mxu0 %v1518
    %1949 = vmatpush1.bf16.msra.mxu0 %v1517
    %1950 = vmatprep.subr.bf16.mxu0 %v1522
    %1951 = vmatpush1.bf16.msra.mxu0 %v1521
    %1952 = vmatprep.subr.bf16.mxu0 %v1526
    %1953 = vmatpush1.bf16.msra.mxu0 %v1525
    %1954 = vmatprep.subr.bf16.mxu0 %v1530
    %1955 = vmatpush1.bf16.msra.mxu0 %v1529
    %1956 = vmatprep.subr.bf16.mxu0 %v1534
    %1957 = vmatpush1.bf16.msra.mxu0 %v1533
    %1958 = vmatprep.subr.bf16.mxu0 %v1538
    %1959 = vmatpush1.bf16.msra.mxu0 %v1537
    %1960 = vmatprep.subr.bf16.mxu0 %v1542
    %1961 = vmatpush1.bf16.msra.mxu0 %v1541
    %1962 = vmatprep.mubr.bf16.mxu0 %v512
    %1963 = vmatmul.mubr.bf16.gmra.mrb[0].mxu0 %v508
    %v1964 = vpop.f32.mrb[0].mxu0
    %v1965 = vadd.f32 %v1922, %v1964
    %v1966 = vpop.f32.mrb[0].mxu0
    %v1967 = vadd.f32 %v1924, %v1966
    %v1968 = vpop.f32.mrb[0].mxu0
    %v1969 = vadd.f32 %v1926, %v1968
    %v1970 = vpop.f32.mrb[0].mxu0
    %v1971 = vadd.f32 %v1928, %v1970
    %1972 = vdwg.mxu0
    %1973 = vmatprep.subr.bf16.mxu0 %v1292
    %1974 = vmatpush1.bf16.msra.mxu0 %v1291
    %1975 = vmatprep.subr.bf16.mxu0 %v1296
    %1976 = vmatpush1.bf16.msra.mxu0 %v1295
    %1977 = vmatprep.subr.bf16.mxu0 %v1300
    %1978 = vmatpush1.bf16.msra.mxu0 %v1299
    %1979 = vmatprep.subr.bf16.mxu0 %v1304
    %1980 = vmatpush1.bf16.msra.mxu0 %v1303
    %1981 = vmatprep.subr.bf16.mxu0 %v1308
    %1982 = vmatpush1.bf16.msra.mxu0 %v1307
    %1983 = vmatprep.subr.bf16.mxu0 %v1312
    %1984 = vmatpush1.bf16.msra.mxu0 %v1311
    %1985 = vmatprep.subr.bf16.mxu0 %v1316
    %1986 = vmatpush1.bf16.msra.mxu0 %v1315
    %1987 = vmatprep.subr.bf16.mxu0 %v1320
    %1988 = vmatpush1.bf16.msra.mxu0 %v1319
    %1989 = vmatprep.subr.bf16.mxu0 %v1324
    %1990 = vmatpush1.bf16.msra.mxu0 %v1323
    %1991 = vmatprep.subr.bf16.mxu0 %v1328
    %1992 = vmatpush1.bf16.msra.mxu0 %v1327
    %1993 = vmatprep.subr.bf16.mxu0 %v1332
    %1994 = vmatpush1.bf16.msra.mxu0 %v1331
    %1995 = vmatprep.subr.bf16.mxu0 %v1336
    %1996 = vmatpush1.bf16.msra.mxu0 %v1335
    %1997 = vmatprep.subr.bf16.mxu0 %v1340
    %1998 = vmatpush1.bf16.msra.mxu0 %v1339
    %1999 = vmatprep.subr.bf16.mxu0 %v1344
    %2000 = vmatpush1.bf16.msra.mxu0 %v1343
    %2001 = vmatprep.subr.bf16.mxu0 %v1348
    %2002 = vmatpush1.bf16.msra.mxu0 %v1347
    %2003 = vmatprep.subr.bf16.mxu0 %v1352
    %2004 = vmatpush1.bf16.msra.mxu0 %v1351
    %2005 = vmatprep.mubr.bf16.mxu0 %v509
    %2006 = vmatmul.mubr.bf16.gmra.mrb[0].mxu0 %v505
    %v2007 = vpop.f32.mrb[0].mxu0
    %v2008 = vadd.f32 %v360, %v2007
    %v2009 = vpop.f32.mrb[0].mxu0
    %v2010 = vadd.f32 %v364, %v2009
    %v2011 = vpop.f32.mrb[0].mxu0
    %v2012 = vadd.f32 %v360, %v2011
    %v2013 = vpop.f32.mrb[0].mxu0
    %v2014 = vadd.f32 %v364, %v2013
    %2015 = vdwg.mxu0
    %2016 = vmatprep.subr.bf16.mxu0 %v1356
    %2017 = vmatpush1.bf16.msra.mxu0 %v1355
    %2018 = vmatprep.subr.bf16.mxu0 %v1360
    %2019 = vmatpush1.bf16.msra.mxu0 %v1359
    %2020 = vmatprep.subr.bf16.mxu0 %v1364
    %2021 = vmatpush1.bf16.msra.mxu0 %v1363
    %2022 = vmatprep.subr.bf16.mxu0 %v1368
    %2023 = vmatpush1.bf16.msra.mxu0 %v1367
    %2024 = vmatprep.subr.bf16.mxu0 %v1372
    %2025 = vmatpush1.bf16.msra.mxu0 %v1371
    %2026 = vmatprep.subr.bf16.mxu0 %v1376
    %2027 = vmatpush1.bf16.msra.mxu0 %v1375
    %2028 = vmatprep.subr.bf16.mxu0 %v1380
    %2029 = vmatpush1.bf16.msra.mxu0 %v1379
    %2030 = vmatprep.subr.bf16.mxu0 %v1384
    %2031 = vmatpush1.bf16.msra.mxu0 %v1383
    %2032 = vmatprep.subr.bf16.mxu0 %v1388
    %2033 = vmatpush1.bf16.msra.mxu0 %v1387
    %2034 = vmatprep.subr.bf16.mxu0 %v1392
    %2035 = vmatpush1.bf16.msra.mxu0 %v1391
    %2036 = vmatprep.subr.bf16.mxu0 %v1396
    %2037 = vmatpush1.bf16.msra.mxu0 %v1395
    %2038 = vmatprep.subr.bf16.mxu0 %v1400
    %2039 = vmatpush1.bf16.msra.mxu0 %v1399
    %2040 = vmatprep.subr.bf16.mxu0 %v1404
    %2041 = vmatpush1.bf16.msra.mxu0 %v1403
    %2042 = vmatprep.subr.bf16.mxu0 %v1408
    %2043 = vmatpush1.bf16.msra.mxu0 %v1407
    %2044 = vmatprep.subr.bf16.mxu0 %v1412
    %2045 = vmatpush1.bf16.msra.mxu0 %v1411
    %2046 = vmatprep.subr.bf16.mxu0 %v1416
    %2047 = vmatpush1.bf16.msra.mxu0 %v1415
    %2048 = vmatprep.mubr.bf16.mxu0 %v510
    %2049 = vmatmul.mubr.bf16.gmra.mrb[0].mxu0 %v506
    %v2050 = vpop.f32.mrb[0].mxu0
    %v2051 = vadd.f32 %v2008, %v2050
    %v2052 = vpop.f32.mrb[0].mxu0
    %v2053 = vadd.f32 %v2010, %v2052
    %v2054 = vpop.f32.mrb[0].mxu0
    %v2055 = vadd.f32 %v2012, %v2054
    %v2056 = vpop.f32.mrb[0].mxu0
    %v2057 = vadd.f32 %v2014, %v2056
    %2058 = vdwg.mxu0
    %2059 = vmatprep.subr.bf16.mxu0 %v1420
    %2060 = vmatpush1.bf16.msra.mxu0 %v1419
    %2061 = vmatprep.subr.bf16.mxu0 %v1424
    %2062 = vmatpush1.bf16.msra.mxu0 %v1423
    %2063 = vmatprep.subr.bf16.mxu0 %v1428
    %2064 = vmatpush1.bf16.msra.mxu0 %v1427
    %2065 = vmatprep.subr.bf16.mxu0 %v1432
    %2066 = vmatpush1.bf16.msra.mxu0 %v1431
    %2067 = vmatprep.subr.bf16.mxu0 %v1436
    %2068 = vmatpush1.bf16.msra.mxu0 %v1435
    %2069 = vmatprep.subr.bf16.mxu0 %v1440
    %2070 = vmatpush1.bf16.msra.mxu0 %v1439
    %2071 = vmatprep.subr.bf16.mxu0 %v1444
    %2072 = vmatpush1.bf16.msra.mxu0 %v1443
    %2073 = vmatprep.subr.bf16.mxu0 %v1448
    %2074 = vmatpush1.bf16.msra.mxu0 %v1447
    %2075 = vmatprep.subr.bf16.mxu0 %v1452
    %2076 = vmatpush1.bf16.msra.mxu0 %v1451
    %2077 = vmatprep.subr.bf16.mxu0 %v1456
    %2078 = vmatpush1.bf16.msra.mxu0 %v1455
    %2079 = vmatprep.subr.bf16.mxu0 %v1460
    %2080 = vmatpush1.bf16.msra.mxu0 %v1459
    %2081 = vmatprep.subr.bf16.mxu0 %v1464
    %2082 = vmatpush1.bf16.msra.mxu0 %v1463
    %2083 = vmatprep.subr.bf16.mxu0 %v1468
    %2084 = vmatpush1.bf16.msra.mxu0 %v1467
    %2085 = vmatprep.subr.bf16.mxu0 %v1472
    %2086 = vmatpush1.bf16.msra.mxu0 %v1471
    %2087 = vmatprep.subr.bf16.mxu0 %v1476
    %2088 = vmatpush1.bf16.msra.mxu0 %v1475
    %2089 = vmatprep.subr.bf16.mxu0 %v1480
    %2090 = vmatpush1.bf16.msra.mxu0 %v1479
    %2091 = vmatprep.mubr.bf16.mxu0 %v511
    %2092 = vmatmul.mubr.bf16.gmra.mrb[0].mxu0 %v507
    %v2093 = vpop.f32.mrb[0].mxu0
    %v2094 = vadd.f32 %v2051, %v2093
    %v2095 = vpop.f32.mrb[0].mxu0
    %v2096 = vadd.f32 %v2053, %v2095
    %v2097 = vpop.f32.mrb[0].mxu0
    %v2098 = vadd.f32 %v2055, %v2097
    %v2099 = vpop.f32.mrb[0].mxu0
    %v2100 = vadd.f32 %v2057, %v2099
    %2101 = vdwg.mxu0
    %2102 = vmatprep.subr.bf16.mxu0 %v1484
    %2103 = vmatpush1.bf16.msra.mxu0 %v1483
    %2104 = vmatprep.subr.bf16.mxu0 %v1488
    %2105 = vmatpush1.bf16.msra.mxu0 %v1487
    %2106 = vmatprep.subr.bf16.mxu0 %v1492
    %2107 = vmatpush1.bf16.msra.mxu0 %v1491
    %2108 = vmatprep.subr.bf16.mxu0 %v1496
    %2109 = vmatpush1.bf16.msra.mxu0 %v1495
    %2110 = vmatprep.subr.bf16.mxu0 %v1500
    %2111 = vmatpush1.bf16.msra.mxu0 %v1499
    %2112 = vmatprep.subr.bf16.mxu0 %v1504
    %2113 = vmatpush1.bf16.msra.mxu0 %v1503
    %2114 = vmatprep.subr.bf16.mxu0 %v1508
    %2115 = vmatpush1.bf16.msra.mxu0 %v1507
    %2116 = vmatprep.subr.bf16.mxu0 %v1512
    %2117 = vmatpush1.bf16.msra.mxu0 %v1511
    %2118 = vmatprep.subr.bf16.mxu0 %v1516
    %2119 = vmatpush1.bf16.msra.mxu0 %v1515
    %2120 = vmatprep.subr.bf16.mxu0 %v1520
    %2121 = vmatpush1.bf16.msra.mxu0 %v1519
    %2122 = vmatprep.subr.bf16.mxu0 %v1524
    %2123 = vmatpush1.bf16.msra.mxu0 %v1523
    %2124 = vmatprep.subr.bf16.mxu0 %v1528
    %2125 = vmatpush1.bf16.msra.mxu0 %v1527
    %2126 = vmatprep.subr.bf16.mxu0 %v1532
    %2127 = vmatpush1.bf16.msra.mxu0 %v1531
    %2128 = vmatprep.subr.bf16.mxu0 %v1536
    %2129 = vmatpush1.bf16.msra.mxu0 %v1535
    %2130 = vmatprep.subr.bf16.mxu0 %v1540
    %2131 = vmatpush1.bf16.msra.mxu0 %v1539
    %2132 = vmatprep.subr.bf16.mxu0 %v1544
    %2133 = vmatpush1.bf16.msra.mxu0 %v1543
    %2134 = vmatprep.mubr.bf16.mxu0 %v512
    %2135 = vmatmul.mubr.bf16.gmra.mrb[0].mxu0 %v508
    %v2136 = vpop.f32.mrb[0].mxu0
    %v2137 = vadd.f32 %v2094, %v2136
    %v2138 = vpop.f32.mrb[0].mxu0
    %v2139 = vadd.f32 %v2096, %v2138
    %v2140 = vpop.f32.mrb[0].mxu0
    %v2141 = vadd.f32 %v2098, %v2140
    %v2142 = vpop.f32.mrb[0].mxu0
    %v2143 = vadd.f32 %v2100, %v2142
    %2144 = vdwg.mxu0
    %v2145 = vmax.f32 %v1965, 0.0
    %v2146 = vmax.f32 %v1967, 0.0
    %v2147 = vmax.f32 %v2137, 0.0
    %v2148 = vmax.f32 %v2139, 0.0
    %v2149 = vmax.f32 %v1969, 0.0
    %v2150 = vmax.f32 %v1971, 0.0
    %v2151 = vmax.f32 %v2141, 0.0
    %v2152 = vmax.f32 %v2143, 0.0
    %v2153 = vpack.c.bf16 %v2149, %v2145
    %v2154 = vpack.c.bf16 %v2150, %v2146
    %v2155 = vpack.c.bf16 %v2151, %v2147
    %v2156 = vpack.c.bf16 %v2152, %v2148
    %v2157 = vld [vmem:[#allocation7] sm:$0xff]
    %v2158 = vld [vmem:[#allocation7 + $0x8] sm:$0xff]
    %v2159 = vld [vmem:[#allocation7 + $0x10] sm:$0xff]
    %v2160 = vld [vmem:[#allocation7 + $0x18] sm:$0xff]
    %v2161 = vld [vmem:[#allocation7 + $0x20] sm:$0xff]
    %v2162 = vld [vmem:[#allocation7 + $0x28] sm:$0xff]
    %v2163 = vld [vmem:[#allocation7 + $0x30] sm:$0xff]
    %v2164 = vld [vmem:[#allocation7 + $0x38] sm:$0xff]
    %v2165 = vld [vmem:[#allocation7 + $0x40] sm:$0xff]
    %v2166 = vld [vmem:[#allocation7 + $0x48] sm:$0xff]
    %v2167 = vld [vmem:[#allocation7 + $0x50] sm:$0xff]
    %v2168 = vld [vmem:[#allocation7 + $0x58] sm:$0xff]
    %v2169 = vld [vmem:[#allocation7 + $0x60] sm:$0xff]
    %v2170 = vld [vmem:[#allocation7 + $0x68] sm:$0xff]
    %v2171 = vld [vmem:[#allocation7 + $0x70] sm:$0xff]
    %v2172 = vld [vmem:[#allocation7 + $0x78] sm:$0xff]
    %v2173 = vld [vmem:[#allocation7 + $0x80] sm:$0xff]
    %v2174 = vld [vmem:[#allocation7 + $0x88] sm:$0xff]
    %v2175 = vld [vmem:[#allocation7 + $0x90] sm:$0xff]
    %v2176 = vld [vmem:[#allocation7 + $0x98] sm:$0xff]
    %v2177 = vld [vmem:[#allocation7 + $0xa0] sm:$0xff]
    %v2178 = vld [vmem:[#allocation7 + $0xa8] sm:$0xff]
    %v2179 = vld [vmem:[#allocation7 + $0xb0] sm:$0xff]
    %v2180 = vld [vmem:[#allocation7 + $0xb8] sm:$0xff]
    %v2181 = vld [vmem:[#allocation7 + $0xc0] sm:$0xff]
    %v2182 = vld [vmem:[#allocation7 + $0xc8] sm:$0xff]
    %v2183 = vld [vmem:[#allocation7 + $0xd0] sm:$0xff]
    %v2184 = vld [vmem:[#allocation7 + $0xd8] sm:$0xff]
    %v2185 = vld [vmem:[#allocation7 + $0xe0] sm:$0xff]
    %v2186 = vld [vmem:[#allocation7 + $0xe8] sm:$0xff]
    %v2187 = vld [vmem:[#allocation7 + $0xf0] sm:$0xff]
    %v2188 = vld [vmem:[#allocation7 + $0xf8] sm:$0xff]
    %v2189 = vld [vmem:[#allocation7 + $0x100] sm:$0xff]
    %v2190 = vld [vmem:[#allocation7 + $0x108] sm:$0xff]
    %v2191 = vld [vmem:[#allocation7 + $0x110] sm:$0xff]
    %v2192 = vld [vmem:[#allocation7 + $0x118] sm:$0xff]
    %v2193 = vld [vmem:[#allocation7 + $0x120] sm:$0xff]
    %v2194 = vld [vmem:[#allocation7 + $0x128] sm:$0xff]
    %v2195 = vld [vmem:[#allocation7 + $0x130] sm:$0xff]
    %v2196 = vld [vmem:[#allocation7 + $0x138] sm:$0xff]
    %v2197 = vld [vmem:[#allocation7 + $0x140] sm:$0xff]
    %v2198 = vld [vmem:[#allocation7 + $0x148] sm:$0xff]
    %v2199 = vld [vmem:[#allocation7 + $0x150] sm:$0xff]
    %v2200 = vld [vmem:[#allocation7 + $0x158] sm:$0xff]
    %v2201 = vld [vmem:[#allocation7 + $0x160] sm:$0xff]
    %v2202 = vld [vmem:[#allocation7 + $0x168] sm:$0xff]
    %v2203 = vld [vmem:[#allocation7 + $0x170] sm:$0xff]
    %v2204 = vld [vmem:[#allocation7 + $0x178] sm:$0xff]
    %v2205 = vld [vmem:[#allocation7 + $0x180] sm:$0xff]
    %v2206 = vld [vmem:[#allocation7 + $0x188] sm:$0xff]
    %v2207 = vld [vmem:[#allocation7 + $0x190] sm:$0xff]
    %v2208 = vld [vmem:[#allocation7 + $0x198] sm:$0xff]
    %v2209 = vld [vmem:[#allocation7 + $0x1a0] sm:$0xff]
    %v2210 = vld [vmem:[#allocation7 + $0x1a8] sm:$0xff]
    %v2211 = vld [vmem:[#allocation7 + $0x1b0] sm:$0xff]
    %v2212 = vld [vmem:[#allocation7 + $0x1b8] sm:$0xff]
    %v2213 = vld [vmem:[#allocation7 + $0x1c0] sm:$0xff]
    %v2214 = vld [vmem:[#allocation7 + $0x1c8] sm:$0xff]
    %v2215 = vld [vmem:[#allocation7 + $0x1d0] sm:$0xff]
    %v2216 = vld [vmem:[#allocation7 + $0x1d8] sm:$0xff]
    %v2217 = vld [vmem:[#allocation7 + $0x1e0] sm:$0xff]
    %v2218 = vld [vmem:[#allocation7 + $0x1e8] sm:$0xff]
    %v2219 = vld [vmem:[#allocation7 + $0x1f0] sm:$0xff]
    %v2220 = vld [vmem:[#allocation7 + $0x1f8] sm:$0xff]
    %v2221 = vld [vmem:[%s4] sm:$0x3]
    %v2223 = vlaneseq
    %v2224 = vshrl.u32 %v2223, 7
    %v2225 = vsub.s32 0, %v2224
    %v2226 = vrot.slane %v2221, %v2225
    %v2227 = vlaneseq
    %v2228 = vshrl.u32 %v2227, 7
    %v2229 = vsub.s32 1, %v2228
    %v2230 = vrot.slane %v2221, %v2229
    %v2297 = vunpack.c.l.b16 %v2157
    %v2298 = vunpack.c.h.b16 %v2157
    %v2299 = vunpack.c.l.b16 %v2158
    %v2300 = vunpack.c.h.b16 %v2158
    %v2301 = vunpack.c.l.b16 %v2159
    %v2302 = vunpack.c.h.b16 %v2159
    %v2303 = vunpack.c.l.b16 %v2160
    %v2304 = vunpack.c.h.b16 %v2160
    %v2305 = vunpack.c.l.b16 %v2161
    %v2306 = vunpack.c.h.b16 %v2161
    %v2307 = vunpack.c.l.b16 %v2162
    %v2308 = vunpack.c.h.b16 %v2162
    %v2309 = vunpack.c.l.b16 %v2163
    %v2310 = vunpack.c.h.b16 %v2163
    %v2311 = vunpack.c.l.b16 %v2164
    %v2312 = vunpack.c.h.b16 %v2164
    %v2313 = vunpack.c.l.b16 %v2165
    %v2314 = vunpack.c.h.b16 %v2165
    %v2315 = vunpack.c.l.b16 %v2166
    %v2316 = vunpack.c.h.b16 %v2166
    %v2317 = vunpack.c.l.b16 %v2167
    %v2318 = vunpack.c.h.b16 %v2167
    %v2319 = vunpack.c.l.b16 %v2168
    %v2320 = vunpack.c.h.b16 %v2168
    %v2321 = vunpack.c.l.b16 %v2169
    %v2322 = vunpack.c.h.b16 %v2169
    %v2323 = vunpack.c.l.b16 %v2170
    %v2324 = vunpack.c.h.b16 %v2170
    %v2325 = vunpack.c.l.b16 %v2171
    %v2326 = vunpack.c.h.b16 %v2171
    %v2327 = vunpack.c.l.b16 %v2172
    %v2328 = vunpack.c.h.b16 %v2172
    %v2329 = vunpack.c.l.b16 %v2173
    %v2330 = vunpack.c.h.b16 %v2173
    %v2331 = vunpack.c.l.b16 %v2174
    %v2332 = vunpack.c.h.b16 %v2174
    %v2333 = vunpack.c.l.b16 %v2175
    %v2334 = vunpack.c.h.b16 %v2175
    %v2335 = vunpack.c.l.b16 %v2176
    %v2336 = vunpack.c.h.b16 %v2176
    %v2337 = vunpack.c.l.b16 %v2177
    %v2338 = vunpack.c.h.b16 %v2177
    %v2339 = vunpack.c.l.b16 %v2178
    %v2340 = vunpack.c.h.b16 %v2178
    %v2341 = vunpack.c.l.b16 %v2179
    %v2342 = vunpack.c.h.b16 %v2179
    %v2343 = vunpack.c.l.b16 %v2180
    %v2344 = vunpack.c.h.b16 %v2180
    %v2345 = vunpack.c.l.b16 %v2181
    %v2346 = vunpack.c.h.b16 %v2181
    %v2347 = vunpack.c.l.b16 %v2182
    %v2348 = vunpack.c.h.b16 %v2182
    %v2349 = vunpack.c.l.b16 %v2183
    %v2350 = vunpack.c.h.b16 %v2183
    %v2351 = vunpack.c.l.b16 %v2184
    %v2352 = vunpack.c.h.b16 %v2184
    %v2353 = vunpack.c.l.b16 %v2185
    %v2354 = vunpack.c.h.b16 %v2185
    %v2355 = vunpack.c.l.b16 %v2186
    %v2356 = vunpack.c.h.b16 %v2186
    %v2357 = vunpack.c.l.b16 %v2187
    %v2358 = vunpack.c.h.b16 %v2187
    %v2359 = vunpack.c.l.b16 %v2188
    %v2360 = vunpack.c.h.b16 %v2188
    %v2361 = vunpack.c.l.b16 %v2189
    %v2362 = vunpack.c.h.b16 %v2189
    %v2363 = vunpack.c.l.b16 %v2190
    %v2364 = vunpack.c.h.b16 %v2190
    %v2365 = vunpack.c.l.b16 %v2191
    %v2366 = vunpack.c.h.b16 %v2191
    %v2367 = vunpack.c.l.b16 %v2192
    %v2368 = vunpack.c.h.b16 %v2192
    %v2369 = vunpack.c.l.b16 %v2193
    %v2370 = vunpack.c.h.b16 %v2193
    %v2371 = vunpack.c.l.b16 %v2194
    %v2372 = vunpack.c.h.b16 %v2194
    %v2373 = vunpack.c.l.b16 %v2195
    %v2374 = vunpack.c.h.b16 %v2195
    %v2375 = vunpack.c.l.b16 %v2196
    %v2376 = vunpack.c.h.b16 %v2196
    %v2377 = vunpack.c.l.b16 %v2197
    %v2378 = vunpack.c.h.b16 %v2197
    %v2379 = vunpack.c.l.b16 %v2198
    %v2380 = vunpack.c.h.b16 %v2198
    %v2381 = vunpack.c.l.b16 %v2199
    %v2382 = vunpack.c.h.b16 %v2199
    %v2383 = vunpack.c.l.b16 %v2200
    %v2384 = vunpack.c.h.b16 %v2200
    %v2385 = vunpack.c.l.b16 %v2201
    %v2386 = vunpack.c.h.b16 %v2201
    %v2387 = vunpack.c.l.b16 %v2202
    %v2388 = vunpack.c.h.b16 %v2202
    %v2389 = vunpack.c.l.b16 %v2203
    %v2390 = vunpack.c.h.b16 %v2203
    %v2391 = vunpack.c.l.b16 %v2204
    %v2392 = vunpack.c.h.b16 %v2204
    %v2393 = vunpack.c.l.b16 %v2205
    %v2394 = vunpack.c.h.b16 %v2205
    %v2395 = vunpack.c.l.b16 %v2206
    %v2396 = vunpack.c.h.b16 %v2206
    %v2397 = vunpack.c.l.b16 %v2207
    %v2398 = vunpack.c.h.b16 %v2207
    %v2399 = vunpack.c.l.b16 %v2208
    %v2400 = vunpack.c.h.b16 %v2208
    %v2401 = vunpack.c.l.b16 %v2209
    %v2402 = vunpack.c.h.b16 %v2209
    %v2403 = vunpack.c.l.b16 %v2210
    %v2404 = vunpack.c.h.b16 %v2210
    %v2405 = vunpack.c.l.b16 %v2211
    %v2406 = vunpack.c.h.b16 %v2211
    %v2407 = vunpack.c.l.b16 %v2212
    %v2408 = vunpack.c.h.b16 %v2212
    %v2409 = vunpack.c.l.b16 %v2213
    %v2410 = vunpack.c.h.b16 %v2213
    %v2411 = vunpack.c.l.b16 %v2214
    %v2412 = vunpack.c.h.b16 %v2214
    %v2413 = vunpack.c.l.b16 %v2215
    %v2414 = vunpack.c.h.b16 %v2215
    %v2415 = vunpack.c.l.b16 %v2216
    %v2416 = vunpack.c.h.b16 %v2216
    %v2417 = vunpack.c.l.b16 %v2217
    %v2418 = vunpack.c.h.b16 %v2217
    %v2419 = vunpack.c.l.b16 %v2218
    %v2420 = vunpack.c.h.b16 %v2218
    %v2421 = vunpack.c.l.b16 %v2219
    %v2422 = vunpack.c.h.b16 %v2219
    %v2423 = vunpack.c.l.b16 %v2220
    %v2424 = vunpack.c.h.b16 %v2220
    %v2425 = vpack.c.b16 %v2299, %v2297
    %v2426 = vpack.c.b16 %v2300, %v2298
    %v2427 = vpack.c.b16 %v2303, %v2301
    %v2428 = vpack.c.b16 %v2304, %v2302
    %v2429 = vpack.c.b16 %v2307, %v2305
    %v2430 = vpack.c.b16 %v2308, %v2306
    %v2431 = vpack.c.b16 %v2311, %v2309
    %v2432 = vpack.c.b16 %v2312, %v2310
    %v2433 = vpack.c.b16 %v2315, %v2313
    %v2434 = vpack.c.b16 %v2316, %v2314
    %v2435 = vpack.c.b16 %v2319, %v2317
    %v2436 = vpack.c.b16 %v2320, %v2318
    %v2437 = vpack.c.b16 %v2323, %v2321
    %v2438 = vpack.c.b16 %v2324, %v2322
    %v2439 = vpack.c.b16 %v2327, %v2325
    %v2440 = vpack.c.b16 %v2328, %v2326
    %v2441 = vpack.c.b16 %v2331, %v2329
    %v2442 = vpack.c.b16 %v2332, %v2330
    %v2443 = vpack.c.b16 %v2335, %v2333
    %v2444 = vpack.c.b16 %v2336, %v2334
    %v2445 = vpack.c.b16 %v2339, %v2337
    %v2446 = vpack.c.b16 %v2340, %v2338
    %v2447 = vpack.c.b16 %v2343, %v2341
    %v2448 = vpack.c.b16 %v2344, %v2342
    %v2449 = vpack.c.b16 %v2347, %v2345
    %v2450 = vpack.c.b16 %v2348, %v2346
    %v2451 = vpack.c.b16 %v2351, %v2349
    %v2452 = vpack.c.b16 %v2352, %v2350
    %v2453 = vpack.c.b16 %v2355, %v2353
    %v2454 = vpack.c.b16 %v2356, %v2354
    %v2455 = vpack.c.b16 %v2359, %v2357
    %v2456 = vpack.c.b16 %v2360, %v2358
    %v2457 = vpack.c.b16 %v2363, %v2361
    %v2458 = vpack.c.b16 %v2364, %v2362
    %v2459 = vpack.c.b16 %v2367, %v2365
    %v2460 = vpack.c.b16 %v2368, %v2366
    %v2461 = vpack.c.b16 %v2371, %v2369
    %v2462 = vpack.c.b16 %v2372, %v2370
    %v2463 = vpack.c.b16 %v2375, %v2373
    %v2464 = vpack.c.b16 %v2376, %v2374
    %v2465 = vpack.c.b16 %v2379, %v2377
    %v2466 = vpack.c.b16 %v2380, %v2378
    %v2467 = vpack.c.b16 %v2383, %v2381
    %v2468 = vpack.c.b16 %v2384, %v2382
    %v2469 = vpack.c.b16 %v2387, %v2385
    %v2470 = vpack.c.b16 %v2388, %v2386
    %v2471 = vpack.c.b16 %v2391, %v2389
    %v2472 = vpack.c.b16 %v2392, %v2390
    %v2473 = vpack.c.b16 %v2395, %v2393
    %v2474 = vpack.c.b16 %v2396, %v2394
    %v2475 = vpack.c.b16 %v2399, %v2397
    %v2476 = vpack.c.b16 %v2400, %v2398
    %v2477 = vpack.c.b16 %v2403, %v2401
    %v2478 = vpack.c.b16 %v2404, %v2402
    %v2479 = vpack.c.b16 %v2407, %v2405
    %v2480 = vpack.c.b16 %v2408, %v2406
    %v2481 = vpack.c.b16 %v2411, %v2409
    %v2482 = vpack.c.b16 %v2412, %v2410
    %v2483 = vpack.c.b16 %v2415, %v2413
    %v2484 = vpack.c.b16 %v2416, %v2414
    %v2485 = vpack.c.b16 %v2419, %v2417
    %v2486 = vpack.c.b16 %v2420, %v2418
    %v2487 = vpack.c.b16 %v2423, %v2421
    %v2488 = vpack.c.b16 %v2424, %v2422
    %2553 = vmatprep.subr.bf16.mxu0 %v2426
    %2554 = vmatpush1.bf16.msra.mxu0 %v2425
    %2555 = vmatprep.subr.bf16.mxu0 %v2428
    %2556 = vmatpush1.bf16.msra.mxu0 %v2427
    %2557 = vmatprep.subr.bf16.mxu0 %v2430
    %2558 = vmatpush1.bf16.msra.mxu0 %v2429
    %2559 = vmatprep.subr.bf16.mxu0 %v2432
    %2560 = vmatpush1.bf16.msra.mxu0 %v2431
    %2561 = vmatprep.subr.bf16.mxu0 %v2434
    %2562 = vmatpush1.bf16.msra.mxu0 %v2433
    %2563 = vmatprep.subr.bf16.mxu0 %v2436
    %2564 = vmatpush1.bf16.msra.mxu0 %v2435
    %2565 = vmatprep.subr.bf16.mxu0 %v2438
    %2566 = vmatpush1.bf16.msra.mxu0 %v2437
    %2567 = vmatprep.subr.bf16.mxu0 %v2440
    %2568 = vmatpush1.bf16.msra.mxu0 %v2439
    %2569 = vmatprep.subr.bf16.mxu0 %v2442
    %2570 = vmatpush1.bf16.msra.mxu0 %v2441
    %2571 = vmatprep.subr.bf16.mxu0 %v2444
    %2572 = vmatpush1.bf16.msra.mxu0 %v2443
    %2573 = vmatprep.subr.bf16.mxu0 %v2446
    %2574 = vmatpush1.bf16.msra.mxu0 %v2445
    %2575 = vmatprep.subr.bf16.mxu0 %v2448
    %2576 = vmatpush1.bf16.msra.mxu0 %v2447
    %2577 = vmatprep.subr.bf16.mxu0 %v2450
    %2578 = vmatpush1.bf16.msra.mxu0 %v2449
    %2579 = vmatprep.subr.bf16.mxu0 %v2452
    %2580 = vmatpush1.bf16.msra.mxu0 %v2451
    %2581 = vmatprep.subr.bf16.mxu0 %v2454
    %2582 = vmatpush1.bf16.msra.mxu0 %v2453
    %2583 = vmatprep.subr.bf16.mxu0 %v2456
    %2584 = vmatpush1.bf16.msra.mxu0 %v2455
    %2585 = vmatprep.mubr.bf16.mxu0 %v2154
    %2586 = vmatmul.mubr.bf16.gmra.mrb[0].mxu0 %v2153
    %v2587 = vpop.f32.mrb[0].mxu0
    %v2588 = vadd.f32 %v2226, %v2587
    %v2589 = vpop.f32.mrb[0].mxu0
    %v2590 = vadd.f32 %v2230, %v2589
    %v2591 = vpop.f32.mrb[0].mxu0
    %v2592 = vadd.f32 %v2226, %v2591
    %v2593 = vpop.f32.mrb[0].mxu0
    %v2594 = vadd.f32 %v2230, %v2593
    %2595 = vdwg.mxu0
    %2596 = vmatprep.subr.bf16.mxu0 %v2458
    %2597 = vmatpush1.bf16.msra.mxu0 %v2457
    %2598 = vmatprep.subr.bf16.mxu0 %v2460
    %2599 = vmatpush1.bf16.msra.mxu0 %v2459
    %2600 = vmatprep.subr.bf16.mxu0 %v2462
    %2601 = vmatpush1.bf16.msra.mxu0 %v2461
    %2602 = vmatprep.subr.bf16.mxu0 %v2464
    %2603 = vmatpush1.bf16.msra.mxu0 %v2463
    %2604 = vmatprep.subr.bf16.mxu0 %v2466
    %2605 = vmatpush1.bf16.msra.mxu0 %v2465
    %2606 = vmatprep.subr.bf16.mxu0 %v2468
    %2607 = vmatpush1.bf16.msra.mxu0 %v2467
    %2608 = vmatprep.subr.bf16.mxu0 %v2470
    %2609 = vmatpush1.bf16.msra.mxu0 %v2469
    %2610 = vmatprep.subr.bf16.mxu0 %v2472
    %2611 = vmatpush1.bf16.msra.mxu0 %v2471
    %2612 = vmatprep.subr.bf16.mxu0 %v2474
    %2613 = vmatpush1.bf16.msra.mxu0 %v2473
    %2614 = vmatprep.subr.bf16.mxu0 %v2476
    %2615 = vmatpush1.bf16.msra.mxu0 %v2475
    %2616 = vmatprep.subr.bf16.mxu0 %v2478
    %2617 = vmatpush1.bf16.msra.mxu0 %v2477
    %2618 = vmatprep.subr.bf16.mxu0 %v2480
    %2619 = vmatpush1.bf16.msra.mxu0 %v2479
    %2620 = vmatprep.subr.bf16.mxu0 %v2482
    %2621 = vmatpush1.bf16.msra.mxu0 %v2481
    %2622 = vmatprep.subr.bf16.mxu0 %v2484
    %2623 = vmatpush1.bf16.msra.mxu0 %v2483
    %2624 = vmatprep.subr.bf16.mxu0 %v2486
    %2625 = vmatpush1.bf16.msra.mxu0 %v2485
    %2626 = vmatprep.subr.bf16.mxu0 %v2488
    %2627 = vmatpush1.bf16.msra.mxu0 %v2487
    %2628 = vmatprep.mubr.bf16.mxu0 %v2156
    %2629 = vmatmul.mubr.bf16.gmra.mrb[0].mxu0 %v2155
    %v2630 = vpop.f32.mrb[0].mxu0
    %v2631 = vadd.f32 %v2588, %v2630
    %v2632 = vpop.f32.mrb[0].mxu0
    %v2633 = vadd.f32 %v2590, %v2632
    %v2634 = vpop.f32.mrb[0].mxu0
    %v2635 = vadd.f32 %v2592, %v2634
    %v2636 = vpop.f32.mrb[0].mxu0
    %v2637 = vadd.f32 %v2594, %v2636
    %2638 = vdwg.mxu0
    %v2639 = vmax.f32 %v2631, 0.0
    %v2640 = vmax.f32 %v2633, 0.0
    %v2641 = vmax.f32 %v2635, 0.0
    %v2642 = vmax.f32 %v2637, 0.0
    %v2643 = vpack.c.bf16 %v2641, %v2639
    %v2644 = vpack.c.bf16 %v2642, %v2640
    %v2645 = vld [vmem:[#allocation8] sm:$0xf]
    %v2646 = vld [vmem:[#allocation8 + $0x4] sm:$0xf]
    %v2647 = vld [vmem:[#allocation8 + $0x8] sm:$0xf]
    %v2648 = vld [vmem:[#allocation8 + $0xc] sm:$0xf]
    %v2649 = vld [vmem:[#allocation8 + $0x10] sm:$0xf]
    %v2650 = vld [vmem:[#allocation8 + $0x14] sm:$0xf]
    %v2651 = vld [vmem:[#allocation8 + $0x18] sm:$0xf]
    %v2652 = vld [vmem:[#allocation8 + $0x1c] sm:$0xf]
    %v2653 = vld [vmem:[#allocation8 + $0x20] sm:$0xf]
    %v2654 = vld [vmem:[#allocation8 + $0x24] sm:$0xf]
    %v2655 = vld [vmem:[#allocation8 + $0x28] sm:$0xf]
    %v2656 = vld [vmem:[#allocation8 + $0x2c] sm:$0xf]
    %v2657 = vld [vmem:[#allocation8 + $0x30] sm:$0xf]
    %v2658 = vld [vmem:[#allocation8 + $0x34] sm:$0xf]
    %v2659 = vld [vmem:[#allocation8 + $0x38] sm:$0xf]
    %v2660 = vld [vmem:[#allocation8 + $0x3c] sm:$0xf]
    %v2661 = vld [vmem:[#allocation8 + $0x40] sm:$0xf]
    %v2662 = vld [vmem:[#allocation8 + $0x44] sm:$0xf]
    %v2663 = vld [vmem:[#allocation8 + $0x48] sm:$0xf]
    %v2664 = vld [vmem:[#allocation8 + $0x4c] sm:$0xf]
    %v2665 = vld [vmem:[#allocation8 + $0x50] sm:$0xf]
    %v2666 = vld [vmem:[#allocation8 + $0x54] sm:$0xf]
    %v2667 = vld [vmem:[#allocation8 + $0x58] sm:$0xf]
    %v2668 = vld [vmem:[#allocation8 + $0x5c] sm:$0xf]
    %v2669 = vld [vmem:[#allocation8 + $0x60] sm:$0xf]
    %v2670 = vld [vmem:[#allocation8 + $0x64] sm:$0xf]
    %v2671 = vld [vmem:[#allocation8 + $0x68] sm:$0xf]
    %v2672 = vld [vmem:[#allocation8 + $0x6c] sm:$0xf]
    %v2673 = vld [vmem:[#allocation8 + $0x70] sm:$0xf]
    %v2674 = vld [vmem:[#allocation8 + $0x74] sm:$0xf]
    %v2675 = vld [vmem:[#allocation8 + $0x78] sm:$0xf]
    %v2676 = vld [vmem:[#allocation8 + $0x7c] sm:$0xf]
    %v2677 = vld [vmem:[%s6] sm:$0x1]
    %v2679 = vlaneseq
    %v2680 = vshrl.u32 %v2679, 7
    %v2681 = vsub.s32 0, %v2680
    %v2682 = vrot.slane %v2677, %v2681
    %v2716 = vunpack.c.l.b16 %v2645
    %v2717 = vunpack.c.l.b16 %v2646
    %v2718 = vunpack.c.l.b16 %v2647
    %v2719 = vunpack.c.l.b16 %v2648
    %v2720 = vunpack.c.l.b16 %v2649
    %v2721 = vunpack.c.l.b16 %v2650
    %v2722 = vunpack.c.l.b16 %v2651
    %v2723 = vunpack.c.l.b16 %v2652
    %v2724 = vunpack.c.l.b16 %v2653
    %v2725 = vunpack.c.l.b16 %v2654
    %v2726 = vunpack.c.l.b16 %v2655
    %v2727 = vunpack.c.l.b16 %v2656
    %v2728 = vunpack.c.l.b16 %v2657
    %v2729 = vunpack.c.l.b16 %v2658
    %v2730 = vunpack.c.l.b16 %v2659
    %v2731 = vunpack.c.l.b16 %v2660
    %v2732 = vunpack.c.l.b16 %v2661
    %v2733 = vunpack.c.l.b16 %v2662
    %v2734 = vunpack.c.l.b16 %v2663
    %v2735 = vunpack.c.l.b16 %v2664
    %v2736 = vunpack.c.l.b16 %v2665
    %v2737 = vunpack.c.l.b16 %v2666
    %v2738 = vunpack.c.l.b16 %v2667
    %v2739 = vunpack.c.l.b16 %v2668
    %v2740 = vunpack.c.l.b16 %v2669
    %v2741 = vunpack.c.l.b16 %v2670
    %v2742 = vunpack.c.l.b16 %v2671
    %v2743 = vunpack.c.l.b16 %v2672
    %v2744 = vunpack.c.l.b16 %v2673
    %v2745 = vunpack.c.l.b16 %v2674
    %v2746 = vunpack.c.l.b16 %v2675
    %v2747 = vunpack.c.l.b16 %v2676
    %v2748 = vpack.c.b16 %v2717, %v2716
    %v2749 = vpack.c.b16 %v2719, %v2718
    %v2750 = vpack.c.b16 %v2721, %v2720
    %v2751 = vpack.c.b16 %v2723, %v2722
    %v2752 = vpack.c.b16 %v2725, %v2724
    %v2753 = vpack.c.b16 %v2727, %v2726
    %v2754 = vpack.c.b16 %v2729, %v2728
    %v2755 = vpack.c.b16 %v2731, %v2730
    %v2756 = vpack.c.b16 %v2733, %v2732
    %v2757 = vpack.c.b16 %v2735, %v2734
    %v2758 = vpack.c.b16 %v2737, %v2736
    %v2759 = vpack.c.b16 %v2739, %v2738
    %v2760 = vpack.c.b16 %v2741, %v2740
    %v2761 = vpack.c.b16 %v2743, %v2742
    %v2762 = vpack.c.b16 %v2745, %v2744
    %v2763 = vpack.c.b16 %v2747, %v2746
    %2780 = vmatprep.subr.bf16.mxu0 0
    %2781 = vmatpush1.bf16.msra.mxu0 %v2748
    %2782 = vmatprep.subr.bf16.mxu0 0
    %2783 = vmatpush1.bf16.msra.mxu0 %v2749
    %2784 = vmatprep.subr.bf16.mxu0 0
    %2785 = vmatpush1.bf16.msra.mxu0 %v2750
    %2786 = vmatprep.subr.bf16.mxu0 0
    %2787 = vmatpush1.bf16.msra.mxu0 %v2751
    %2788 = vmatprep.subr.bf16.mxu0 0
    %2789 = vmatpush1.bf16.msra.mxu0 %v2752
    %2790 = vmatprep.subr.bf16.mxu0 0
    %2791 = vmatpush1.bf16.msra.mxu0 %v2753
    %2792 = vmatprep.subr.bf16.mxu0 0
    %2793 = vmatpush1.bf16.msra.mxu0 %v2754
    %2794 = vmatprep.subr.bf16.mxu0 0
    %2795 = vmatpush1.bf16.msra.mxu0 %v2755
    %2796 = vmatprep.subr.bf16.mxu0 0
    %2797 = vmatpush1.bf16.msra.mxu0 %v2756
    %2798 = vmatprep.subr.bf16.mxu0 0
    %2799 = vmatpush1.bf16.msra.mxu0 %v2757
    %2800 = vmatprep.subr.bf16.mxu0 0
    %2801 = vmatpush1.bf16.msra.mxu0 %v2758
    %2802 = vmatprep.subr.bf16.mxu0 0
    %2803 = vmatpush1.bf16.msra.mxu0 %v2759
    %2804 = vmatprep.subr.bf16.mxu0 0
    %2805 = vmatpush1.bf16.msra.mxu0 %v2760
    %2806 = vmatprep.subr.bf16.mxu0 0
    %2807 = vmatpush1.bf16.msra.mxu0 %v2761
    %2808 = vmatprep.subr.bf16.mxu0 0
    %2809 = vmatpush1.bf16.msra.mxu0 %v2762
    %2810 = vmatprep.subr.bf16.mxu0 0
    %2811 = vmatpush1.bf16.msra.mxu0 %v2763
    %2812 = vmatprep.mubr.bf16.mxu0 %v2644
    %2813 = vmatmul.mubr.bf16.gmra.mrb[0].mxu0 %v2643
    %v2814 = vpop.f32.mrb[0].mxu0
    %v2815 = vadd.f32 %v2682, %v2814
    %v2816 = vpop.f32.mrb[0].mxu0
    %v2817 = vpop.f32.mrb[0].mxu0
    %v2818 = vadd.f32 %v2682, %v2817
    %v2819 = vpop.f32.mrb[0].mxu0
    %2820 = vdwg.mxu0
    %2821 = vst [vmem:[#allocation10] sm:$0xff] %v2815
    %2822 = vst [vmem:[#allocation10 + $0x8] sm:$0xff] %v2818
    // Predicated region
    $region46: #{tpu_custom_call.1} parent=1 // pred_check
      _
    $region47: #{tpu_custom_call.1} parent=1 // pred_check_branch
      %2824 = sbr.rel (0) target = $region49
    $region48: #{tpu_custom_call.1} parent=1 // pred_region
      %s2826 = ssub.s32 256, 256
      %2827 = vsyncadd [#allocation4], %s2826
      %s2828 = sshll.u32 [#allocation10], 4
      %s2829 = int_to_ptr.vmem [resolvable:$true] %s2828
      %2834 = dma.vmem_to_hbm [thread:$0]  %s2829, 256, %s7, [#allocation4], 128, 128, 8
    $region49: #{tpu_custom_call.1} parent=1 // pred_fallthru
      _
    // Predicated region
    $region50: #{tpu_custom_call.1} parent=1 // pred_check
      _
    $region51: #{tpu_custom_call.1} parent=1 // pred_check_branch
      %2836 = sbr.rel (0) target = $region53
    $region52: #{tpu_custom_call.1} parent=1 // pred_region
      %2837 = dma.done [#allocation4], 256
    $region53: #{tpu_custom_call.1} parent=1 // pred_fallthru
      _
    %2838 = vsyncpa [#allocation3], 1
    %2839 = vsyncpa [#allocation6], 1
    %2840 = vsyncpa [#allocation9], 1
    %2841 = vsyncpa [#allocation4], 1

</llo_original>
